<compile_context>
chip_gen: v7x
topology: tpu7x:2x2x1
jax: 0.10.0
libtpu: 0.0.40
codegen_flags: <defaults>
</compile_context>

<pallas_src>
import numpy as np
import jax
import jax.numpy as jnp
from jax.experimental import pallas as pl
from jax.experimental.pallas import tpu as pltpu


# ----------------------------------------------------------------------------
# Host-side precompute: bilinear resize matrices (PyTorch F.interpolate
# semantics, mode='bilinear', align_corners=False, no antialias).
# ----------------------------------------------------------------------------
def _bilinear_resize_matrix(out_size, in_size):
    i = np.arange(out_size, dtype=np.float64)
    scale = in_size / out_size
    src = (i + 0.5) * scale - 0.5
    src = np.maximum(src, 0.0)                     # PyTorch clamps negatives to 0
    x0 = np.minimum(np.floor(src).astype(np.int64), in_size - 1)
    x1 = np.minimum(x0 + 1, in_size - 1)
    lam = src - x0
    W = np.zeros((out_size, in_size), dtype=np.float64)
    idx = np.arange(out_size)
    W[idx, x0] += (1.0 - lam)
    W[idx, x1] += lam
    return W


def build_blur_operators(image_size, stride, timesteps):
    """A[d] is (H, H) with blur_d(X) = A[d] @ X @ A[d]^T per channel."""
    mats = []
    for d in range(timesteps + 1):
        s = image_size - d * stride
        D = _bilinear_resize_matrix(s, image_size)        # (S, H)
        U = _bilinear_resize_matrix(image_size, s)        # (H, S)
        mats.append(U @ D)                                # (H, H)
    A = np.stack(mats, axis=0).astype(np.float32)         # (T+1, H, H)
    At = np.ascontiguousarray(np.transpose(A, (0, 2, 1))) # pre-transposed for MXU
    return jnp.asarray(A), jnp.asarray(At)


def build_blur_kron_matrices(A):
    """Dense kron(A, A) form — used only by the pure-JAX reference check."""
    A = np.asarray(A, dtype=np.float64)
    return jnp.asarray(np.stack([np.kron(a, a) for a in A]), dtype=jnp.float32)


# ----------------------------------------------------------------------------
# Pallas kernel: one grid step per batch sample (axis marked "parallel").
#   blur  = A[t] @ X @ A[t]^T            (separable, batched over channels)
#   h1    = relu(W1^T blur + (b1 + temb[t]))
#   rec   = W2^T h1 + b2
#   out[i]= sum |x - rec|   (broadcast into a 128-lane row)
# ----------------------------------------------------------------------------
def dtls_kernel(t_ref, a_ref, at_ref, temb_ref, x_ref, xf_ref,
                w1t_ref, b1_ref, w2t_ref, b2_ref, out_ref):
    del t_ref                                   # consumed by the index_maps
    A = a_ref[0]                                # (H, H)
    At = at_ref[0]                              # (H, H) = A^T (host pre-transposed)
    x = x_ref[0]                                # (C, H, W)
    xf = xf_ref[0]                              # (C, P)  flattened copy for MLP/L1
    ch, hh, ww = x.shape

    # Separable blur: per channel Y = A @ X @ A^T, batched over channels.
    a_b = jnp.broadcast_to(A[None], (ch, hh, hh))
    at_b = jnp.broadcast_to(At[None], (ch, hh, hh))
    u = jnp.einsum('cph,chw->cpw', a_b, x,
                   preferred_element_type=jnp.float32)     # A @ X
    y = jnp.einsum('cpw,cwq->cpq', u, at_b,
                   preferred_element_type=jnp.float32)     # (A X) @ A^T
    blur = y.reshape(ch, hh * ww)               # (C, P), row-major spatial flatten

    # denoise_fn: pointwise channel-MLP with additive time embedding.
    bias = b1_ref[0] + temb_ref[0, 0]           # fused (HID,) bias (single broadcast)
    h1 = jnp.dot(w1t_ref[...], blur, preferred_element_type=jnp.float32)   # (HID, P)
    h1 = jnp.maximum(h1 + bias[:, None], 0.0)
    rec = jnp.dot(w2t_ref[...], h1, preferred_element_type=jnp.float32)    # (C, P)
    rec = rec + b2_ref[0][:, None]

    # per-sample L1 partial sum, lane-dense unmasked store.
    s = jnp.sum(jnp.abs(xf - rec))
    out_ref[...] = jnp.full(out_ref.shape, s, dtype=jnp.float32)


def dtls_forward(x, t, A, At, temb, w1, b1, w2, b2):
    """x: (B, C, H, W) float32; t: (B,) int32.  Returns scalar L1 loss."""
    b, c, h, w = x.shape
    p = h * w
    hid = temb.shape[-1]
    nt = A.shape[0]

    t = jnp.clip(t.astype(jnp.int32), 0, nt - 1)   # guard the gather index_maps
    xf = x.reshape(b, c, p)                        # wrapper-side flatten (free)
    w1t = w1.T                                     # (HID, C) MXU-natural
    w2t = w2.T                                     # (C, HID) MXU-natural

    partial = pl.pallas_call(
        dtls_kernel,
        out_shape=jax.ShapeDtypeStruct((b, 1, 128), jnp.float32),
        grid_spec=pltpu.PrefetchScalarGridSpec(
            num_scalar_prefetch=1,
            grid=(b,),
            in_specs=[
                pl.BlockSpec((1, h, h), lambda i, t: (t[i], 0, 0)),      # A[t[i]]
                pl.BlockSpec((1, h, h), lambda i, t: (t[i], 0, 0)),      # A^T[t[i]]
                pl.BlockSpec((1, 1, hid), lambda i, t: (t[i], 0, 0)),    # temb[t[i]]
                pl.BlockSpec((1, c, h, w), lambda i, t: (i, 0, 0, 0)),   # x[i] (NCHW)
                pl.BlockSpec((1, c, p), lambda i, t: (i, 0, 0)),         # x_flat[i]
                pl.BlockSpec(w1t.shape, lambda i, t: (0, 0)),            # W1^T
                pl.BlockSpec(b1.shape, lambda i, t: (0, 0)),             # b1
                pl.BlockSpec(w2t.shape, lambda i, t: (0, 0)),            # W2^T
                pl.BlockSpec(b2.shape, lambda i, t: (0, 0)),             # b2
            ],
            out_specs=pl.BlockSpec((1, 1, 128), lambda i, t: (i, 0, 0)),
        ),
        compiler_params=pltpu.CompilerParams(
            dimension_semantics=("parallel",)),
    )(t, A, At, temb, x, xf, w1t, b1, w2t, b2)

    return jnp.sum(partial[:, 0, 0]) / (b * c * h * w)


# Pure-JAX reference using the DENSE kron formulation (independent of the
# separable factorization used in the kernel) for a cross-check.
def dtls_reference(x, t, K, temb, w1, b1, w2, b2):
    b_, c_, h_, w_ = x.shape
    xf = x.reshape(b_, c_, h_ * w_)
    Kt = K[t]                                         # (B, P, P)
    blur = jnp.einsum('bcp,bqp->bcq', xf, Kt)
    h1 = jnp.einsum('cd,bcp->bdp', w1, blur) + b1[0][None, :, None] \
        + temb[t, 0][:, :, None]
    h1 = jnp.maximum(h1, 0.0)
    rec = jnp.einsum('dc,bdp->bcp', w2, h1) + b2[0][None, :, None]
    return jnp.mean(jnp.abs(xf - rec))


if __name__ == "__main__":
    image_size = 16
    stride = 2
    timesteps = 4
    b, c, hid = 2, 4, 32

    key = jax.random.PRNGKey(0)
    kx, kt, k1, k2, k3 = jax.random.split(key, 5)

    x = jax.random.normal(kx, (b, c, image_size, image_size), dtype=jnp.float32)
    # TODO(synk): torch.randint RNG stream is not reproducible in JAX; we use
    # jax.random.randint with the same [0, timesteps] support instead.
    t = jax.random.randint(kt, (b,), 0, timesteps + 1).astype(jnp.int32)

    A, At = build_blur_operators(image_size, stride, timesteps)   # (T+1, 16, 16)
    temb = (0.02 * jax.random.normal(k1, (timesteps + 1, 1, hid))).astype(jnp.float32)
    w1 = (0.1 * jax.random.normal(k2, (c, hid))).astype(jnp.float32)
    b1 = jnp.zeros((1, hid), dtype=jnp.float32)
    w2 = (0.1 * jax.random.normal(k3, (hid, c))).astype(jnp.float32)
    b2 = jnp.zeros((1, c), dtype=jnp.float32)

    loss = dtls_forward(x, t, A, At, temb, w1, b1, w2, b2)
    loss = jax.block_until_ready(loss)

    K = build_blur_kron_matrices(A)                   # reference-only, (T+1, 256, 256)
    ref = dtls_reference(x, t, K, temb, w1, b1, w2, b2)
    np.testing.assert_allclose(np.asarray(loss), np.asarray(ref),
                               rtol=1e-4, atol=1e-4)
    print("KERNEL_OK")
</pallas_src>

<mosaic_0001>
module attributes {stable_mosaic.version = 11 : i64} {
  func.func @dtls_kernel(%arg0: i32, %arg1: memref<2xi32, #tpu.memory_space<smem>>, %arg2: memref<1x16x16xf32, #tpu.memory_space<vmem>>, %arg3: memref<1x16x16xf32, #tpu.memory_space<vmem>>, %arg4: memref<1x1x32xf32, #tpu.memory_space<vmem>>, %arg5: memref<1x4x16x16xf32, #tpu.memory_space<vmem>>, %arg6: memref<1x4x256xf32, #tpu.memory_space<vmem>>, %arg7: memref<32x4xf32, #tpu.memory_space<vmem>>, %arg8: memref<1x32xf32, #tpu.memory_space<vmem>>, %arg9: memref<4x32xf32, #tpu.memory_space<vmem>>, %arg10: memref<1x4xf32, #tpu.memory_space<vmem>>, %arg11: memref<1x1x128xf32, #tpu.memory_space<vmem>>) attributes {dimension_semantics = [#tpu.dimension_semantics<parallel>], iteration_bounds = array<i64: 2>, scalar_prefetch = 1 : i64, scratch_operands = 0 : i64, tpu.core_type = #tpu.core_type<tc>, window_params = [{transform_indices = @transform_0, window_bounds = array<i64: 1, 16, 16>}, {transform_indices = @transform_1, window_bounds = array<i64: 1, 16, 16>}, {transform_indices = @transform_2, window_bounds = array<i64: 1, 1, 32>}, {transform_indices = @transform_3, window_bounds = array<i64: 1, 4, 16, 16>}, {transform_indices = @transform_4, window_bounds = array<i64: 1, 4, 256>}, {pipeline_mode = #tpu.pipeline_mode<synchronous>, transform_indices = @transform_5, window_bounds = array<i64: 32, 4>}, {pipeline_mode = #tpu.pipeline_mode<synchronous>, transform_indices = @transform_6, window_bounds = array<i64: 1, 32>}, {pipeline_mode = #tpu.pipeline_mode<synchronous>, transform_indices = @transform_7, window_bounds = array<i64: 4, 32>}, {pipeline_mode = #tpu.pipeline_mode<synchronous>, transform_indices = @transform_8, window_bounds = array<i64: 1, 4>}, {transform_indices = @transform_9, window_bounds = array<i64: 1, 1, 128>}]} {
    %c0 = arith.constant 0 : index
    %c0_0 = arith.constant 0 : index
    %c0_1 = arith.constant 0 : index
    %0 = vector.load %arg2[%c0, %c0_0, %c0_1] : memref<1x16x16xf32, #tpu.memory_space<vmem>>, vector<1x16x16xf32>
    %1 = vector.shape_cast %0 : vector<1x16x16xf32> to vector<16x16xf32>
    %c0_2 = arith.constant 0 : index
    %c0_3 = arith.constant 0 : index
    %c0_4 = arith.constant 0 : index
    %2 = vector.load %arg3[%c0_2, %c0_3, %c0_4] : memref<1x16x16xf32, #tpu.memory_space<vmem>>, vector<1x16x16xf32>
    %3 = vector.shape_cast %2 : vector<1x16x16xf32> to vector<16x16xf32>
    %c0_5 = arith.constant 0 : index
    %c0_6 = arith.constant 0 : index
    %c0_7 = arith.constant 0 : index
    %c0_8 = arith.constant 0 : index
    %4 = vector.load %arg5[%c0_5, %c0_6, %c0_7, %c0_8] : memref<1x4x16x16xf32, #tpu.memory_space<vmem>>, vector<1x4x16x16xf32>
    %5 = vector.shape_cast %4 : vector<1x4x16x16xf32> to vector<4x16x16xf32>
    %c0_9 = arith.constant 0 : index
    %c0_10 = arith.constant 0 : index
    %c0_11 = arith.constant 0 : index
    %6 = vector.load %arg6[%c0_9, %c0_10, %c0_11] : memref<1x4x256xf32, #tpu.memory_space<vmem>>, vector<1x4x256xf32>
    %7 = vector.shape_cast %6 : vector<1x4x256xf32> to vector<4x256xf32>
    %8 = vector.shape_cast %1 : vector<16x16xf32> to vector<1x16x16xf32>
    %9 = vector.shape_cast %8 : vector<1x16x16xf32> to vector<1x16x16xf32>
    %10 = vector.broadcast %9 : vector<1x16x16xf32> to vector<4x16x16xf32>
    %11 = vector.shape_cast %3 : vector<16x16xf32> to vector<1x16x16xf32>
    %12 = vector.shape_cast %11 : vector<1x16x16xf32> to vector<1x16x16xf32>
    %13 = vector.broadcast %12 : vector<1x16x16xf32> to vector<4x16x16xf32>
    "tpu.trace_start"() <{level = 10 : i32, message = "cph,chw->cpw"}> : () -> ()
    %cst = arith.constant dense<0.000000e+00> : vector<4x16x16xf32>
    %14 = tpu.matmul %10, %5, %cst {dimension_numbers = #tpu.dot_dimension_numbers<[2], [1], [1], [2], [0, 0, 0, 1, 1, 2], [0], [0]>} : vector<4x16x16xf32>, vector<4x16x16xf32>, vector<4x16x16xf32> -> vector<4x16x16xf32>
    "tpu.trace_stop"() : () -> ()
    "tpu.trace_start"() <{level = 10 : i32, message = "cpw,cwq->cpq"}> : () -> ()
    %cst_12 = arith.constant dense<0.000000e+00> : vector<4x16x16xf32>
    %15 = tpu.matmul %14, %13, %cst_12 {dimension_numbers = #tpu.dot_dimension_numbers<[2], [1], [1], [2], [0, 0, 0, 1, 1, 2], [0], [0]>} : vector<4x16x16xf32>, vector<4x16x16xf32>, vector<4x16x16xf32> -> vector<4x16x16xf32>
    "tpu.trace_stop"() : () -> ()
    %16 = vector.shape_cast %15 : vector<4x16x16xf32> to vector<4x256xf32>
    %c0_13 = arith.constant 0 : index
    %c0_14 = arith.constant 0 : index
    %17 = vector.load %arg8[%c0_13, %c0_14] : memref<1x32xf32, #tpu.memory_space<vmem>>, vector<1x32xf32>
    %18 = vector.shape_cast %17 : vector<1x32xf32> to vector<32xf32>
    %c0_15 = arith.constant 0 : index
    %c0_16 = arith.constant 0 : index
    %c0_17 = arith.constant 0 : index
    %19 = vector.load %arg4[%c0_15, %c0_16, %c0_17] : memref<1x1x32xf32, #tpu.memory_space<vmem>>, vector<1x1x32xf32>
    %20 = vector.shape_cast %19 : vector<1x1x32xf32> to vector<32xf32>
    %21 = arith.addf %18, %20 : vector<32xf32>
    %c0_18 = arith.constant 0 : index
    %c0_19 = arith.constant 0 : index
    %22 = vector.load %arg7[%c0_18, %c0_19] : memref<32x4xf32, #tpu.memory_space<vmem>>, vector<32x4xf32>
    %cst_20 = arith.constant dense<0.000000e+00> : vector<32x256xf32>
    %23 = tpu.matmul %22, %16, %cst_20 {dimension_numbers = #tpu.dot_dimension_numbers<[1], [0], [0], [1], [0, 0, 1, 1], [], []>} : vector<32x4xf32>, vector<4x256xf32>, vector<32x256xf32> -> vector<32x256xf32>
    %24 = vector.shape_cast %21 : vector<32xf32> to vector<32x1xf32>
    %25 = vector.broadcast %24 : vector<32x1xf32> to vector<32x256xf32>
    %26 = arith.addf %23, %25 : vector<32x256xf32>
    %cst_21 = arith.constant 0.000000e+00 : f32
    %27 = vector.broadcast %cst_21 : f32 to vector<32x256xf32>
    %28 = arith.maximumf %26, %27 : vector<32x256xf32>
    %c0_22 = arith.constant 0 : index
    %c0_23 = arith.constant 0 : index
    %29 = vector.load %arg9[%c0_22, %c0_23] : memref<4x32xf32, #tpu.memory_space<vmem>>, vector<4x32xf32>
    %cst_24 = arith.constant dense<0.000000e+00> : vector<4x256xf32>
    %30 = tpu.matmul %29, %28, %cst_24 {dimension_numbers = #tpu.dot_dimension_numbers<[1], [0], [0], [1], [0, 0, 1, 1], [], []>} : vector<4x32xf32>, vector<32x256xf32>, vector<4x256xf32> -> vector<4x256xf32>
    %c0_25 = arith.constant 0 : index
    %c0_26 = arith.constant 0 : index
    %31 = vector.load %arg10[%c0_25, %c0_26] : memref<1x4xf32, #tpu.memory_space<vmem>>, vector<1x4xf32>
    %32 = vector.shape_cast %31 : vector<1x4xf32> to vector<4xf32>
    %33 = vector.shape_cast %32 : vector<4xf32> to vector<4x1xf32>
    %34 = vector.broadcast %33 : vector<4x1xf32> to vector<4x256xf32>
    %35 = arith.addf %30, %34 : vector<4x256xf32>
    %36 = arith.subf %7, %35 : vector<4x256xf32>
    %37 = math.absf %36 : vector<4x256xf32>
    %38 = vector.shape_cast %37 : vector<4x256xf32> to vector<1x4x256xf32>
    %cst_27 = arith.constant dense<0.000000e+00> : vector<1xf32>
    %39 = vector.multi_reduction <add>, %38, %cst_27 [1, 2] : vector<1x4x256xf32> to vector<1xf32>
    %40 = vector.shape_cast %39 : vector<1xf32> to vector<1x1x1xf32>
    %41 = vector.extract %40[0, 0, 0] : f32 from vector<1x1x1xf32>
    %42 = vector.broadcast %41 : f32 to vector<1x1x128xf32>
    %c0_28 = arith.constant 0 : index
    %c0_29 = arith.constant 0 : index
    %c0_30 = arith.constant 0 : index
    %43 = vector.load %arg11[%c0_28, %c0_29, %c0_30] : memref<1x1x128xf32, #tpu.memory_space<vmem>>, vector<1x1x128xf32>
    tpu.vector_store %arg11[%c0_28, %c0_29, %c0_30], %42 {strides = array<i32>} : memref<1x1x128xf32, #tpu.memory_space<vmem>>, vector<1x1x128xf32>,
    return
  }
  func.func @transform_0(%arg0: i32, %arg1: memref<2xi32, #tpu.memory_space<smem>>) -> (i32, i32, i32) {
    %0 = arith.index_cast %arg0 : i32 to index
    %1 = memref.load %arg1[%0] : memref<2xi32, #tpu.memory_space<smem>>
    %c0_i32 = arith.constant 0 : i32
    %c0_i32_0 = arith.constant 0 : i32
    %c0_i32_1 = arith.constant 0 : i32
    return %1, %c0_i32, %c0_i32_0 : i32, i32, i32
  }
  func.func @transform_1(%arg0: i32, %arg1: memref<2xi32, #tpu.memory_space<smem>>) -> (i32, i32, i32) {
    %0 = arith.index_cast %arg0 : i32 to index
    %1 = memref.load %arg1[%0] : memref<2xi32, #tpu.memory_space<smem>>
    %c0_i32 = arith.constant 0 : i32
    %c0_i32_0 = arith.constant 0 : i32
    %c0_i32_1 = arith.constant 0 : i32
    return %1, %c0_i32, %c0_i32_0 : i32, i32, i32
  }
  func.func @transform_2(%arg0: i32, %arg1: memref<2xi32, #tpu.memory_space<smem>>) -> (i32, i32, i32) {
    %0 = arith.index_cast %arg0 : i32 to index
    %1 = memref.load %arg1[%0] : memref<2xi32, #tpu.memory_space<smem>>
    %c0_i32 = arith.constant 0 : i32
    %c0_i32_0 = arith.constant 0 : i32
    %c0_i32_1 = arith.constant 0 : i32
    return %1, %c0_i32, %c0_i32_0 : i32, i32, i32
  }
  func.func @transform_3(%arg0: i32, %arg1: memref<2xi32, #tpu.memory_space<smem>>) -> (i32, i32, i32, i32) {
    %c0_i32 = arith.constant 0 : i32
    %c0_i32_0 = arith.constant 0 : i32
    %c0_i32_1 = arith.constant 0 : i32
    %c0_i32_2 = arith.constant 0 : i32
    return %arg0, %c0_i32, %c0_i32_0, %c0_i32_1 : i32, i32, i32, i32
  }
  func.func @transform_4(%arg0: i32, %arg1: memref<2xi32, #tpu.memory_space<smem>>) -> (i32, i32, i32) {
    %c0_i32 = arith.constant 0 : i32
    %c0_i32_0 = arith.constant 0 : i32
    %c0_i32_1 = arith.constant 0 : i32
    return %arg0, %c0_i32, %c0_i32_0 : i32, i32, i32
  }
  func.func @transform_5(%arg0: i32, %arg1: memref<2xi32, #tpu.memory_space<smem>>) -> (i32, i32) {
    %c0_i32 = arith.constant 0 : i32
    %c0_i32_0 = arith.constant 0 : i32
    %c0_i32_1 = arith.constant 0 : i32
    return %c0_i32, %c0_i32_0 : i32, i32
  }
  func.func @transform_6(%arg0: i32, %arg1: memref<2xi32, #tpu.memory_space<smem>>) -> (i32, i32) {
    %c0_i32 = arith.constant 0 : i32
    %c0_i32_0 = arith.constant 0 : i32
    %c0_i32_1 = arith.constant 0 : i32
    return %c0_i32, %c0_i32_0 : i32, i32
  }
  func.func @transform_7(%arg0: i32, %arg1: memref<2xi32, #tpu.memory_space<smem>>) -> (i32, i32) {
    %c0_i32 = arith.constant 0 : i32
    %c0_i32_0 = arith.constant 0 : i32
    %c0_i32_1 = arith.constant 0 : i32
    return %c0_i32, %c0_i32_0 : i32, i32
  }
  func.func @transform_8(%arg0: i32, %arg1: memref<2xi32, #tpu.memory_space<smem>>) -> (i32, i32) {
    %c0_i32 = arith.constant 0 : i32
    %c0_i32_0 = arith.constant 0 : i32
    %c0_i32_1 = arith.constant 0 : i32
    return %c0_i32, %c0_i32_0 : i32, i32
  }
  func.func @transform_9(%arg0: i32, %arg1: memref<2xi32, #tpu.memory_space<smem>>) -> (i32, i32, i32) {
    %c0_i32 = arith.constant 0 : i32
    %c0_i32_0 = arith.constant 0 : i32
    %c0_i32_1 = arith.constant 0 : i32
    return %arg0, %c0_i32, %c0_i32_0 : i32, i32, i32
  }
}

</mosaic_0001>

<llo_original>
// kernel: tpu_custom_call.1
$region0: #{tpu_custom_call.1}
  #allocation0 [shape = 'u32[]', space=smem, size = 0x4, offset = 0x4, fixed_abs, tag = 'smem constant byte address 0x4 - core index']
  #allocation1 [shape = 'u32[144,128]{1,0:T(1,128)}', space=vmem, size = 0x12000, scoped, tag = 'internal scratch']
  #allocation2 [shape = 's32[1]{0}', space=sflag, size = 0x4, scoped, tag = 'scoped memory for tpu_custom_call.1']
  #allocation3 [shape = 'u8[512]{0}', space=smem, size = 0x200, scoped, tag = 'prefetched SMEM operand 0']
  %s0 = inlined_call_operand.vmem [shape: s32[2], index: 0, kind: input, shape index: {}]
  %s1 = inlined_call_operand.hbm [shape: f32[5,16,16], index: 1, kind: input, shape index: {}]
  %s2 = inlined_call_operand.hbm [shape: f32[5,16,16], index: 2, kind: input, shape index: {}]
  %s3 = inlined_call_operand.vmem [shape: f32[5,1,32], index: 3, kind: input, shape index: {}]
  %s4 = inlined_call_operand.hbm [shape: f32[2,4,16,16], index: 4, kind: input, shape index: {}]
  %s5 = inlined_call_operand.vmem [shape: f32[2,4,256], index: 5, kind: input, shape index: {}]
  %s6 = inlined_call_operand.vmem [shape: f32[32,4], index: 6, kind: input, shape index: {}]
  %s7 = inlined_call_operand.vmem [shape: f32[1,32], index: 7, kind: input, shape index: {}]
  %s8 = inlined_call_operand.vmem [shape: f32[4,32], index: 8, kind: input, shape index: {}]
  %s9 = inlined_call_operand.vmem [shape: f32[1,4], index: 9, kind: input, shape index: {}]
  %s10 = inlined_call_operand.hbm [shape: f32[2,1,128], index: 10, kind: output, shape index: {}]
  %s11 = sld [smem:[#allocation0]]
  $region81: #{tpu_custom_call.1} parent=0
    _
  %s13 = ssub.s32 1, %s11
  %s14 = scalar_select 0, %s13, %s11
  %s15 = sshll.u32 %s0, 4
  %s16 = int_to_ptr.vmem [resolvable:$true] %s15
  %18 = dma.vmem_to_smem %s16, 16, [#allocation3], [#allocation2]
  %19 = dma.done [#allocation2], 16
  %20 = sfence
  $region1: #{tpu_custom_call.1} parent=0
    #allocation4 [shape = 'u8[16384]{0}', space=vmem, size = 0x4000, scoped, tag = 'input window, operand 1']
    #allocation5 [shape = 's32[2]{0}', space=sflag, size = 0x8, scoped, tag = 'scoped memory for tpu_custom_call.1']
    #allocation6 [shape = 's32[2]{0}', space=sflag, size = 0x8, scoped, tag = 'scoped memory for tpu_custom_call.1']
    #allocation7 [shape = 'u8[16384]{0}', space=vmem, size = 0x4000, scoped, tag = 'input window, operand 2']
    #allocation8 [shape = 's32[2]{0}', space=sflag, size = 0x8, scoped, tag = 'scoped memory for tpu_custom_call.1']
    #allocation9 [shape = 'u8[65536]{0}', space=vmem, size = 0x10000, scoped, tag = 'input window, operand 4']
    #allocation10 [shape = 'u8[1024]{0}', space=vmem, size = 0x400, scoped, tag = 'output window, operand 0']
    %21 = vsyncpa [#allocation5], 0
    %s22 = scalar_lea.sflag [#allocation5], 1
    %23 = vsyncpa %s22, 0
    %24 = vsyncpa [#allocation8], 0
    %s25 = scalar_lea.sflag [#allocation8], 1
    %26 = vsyncpa %s25, 0
    %27 = vsyncpa [#allocation6], 0
    %s28 = scalar_lea.sflag [#allocation6], 1
    %29 = vsyncpa %s28, 0
    loop: start=0, step=1, limit=4
    $region2: #{tpu_custom_call.1} parent=1 // loop_pre_header
      _
    $region3: #{tpu_custom_call.1} parent=1 // loop_header
      %s31 = sphi 0, %s35
      %p32 = scmp.ge.s32.totalorder %s31, 4
      %s43 = sphi 0, %s45
      %s46 = sphi 0, %s43
      %s47 = sphi 0, %s46
      %s63 = sphi 0, %s47
      %s71 = sphi 0, %s73
      %s74 = sphi 0, %s71
      %s75 = sphi 0, %s74
      %s91 = sphi 0, %s75
      %s99 = sphi 0, %s101
      %s102 = sphi 0, %s99
      %s103 = sphi 0, %s102
      %s119 = sphi 0, %s103
      %s125 = sphi 0, %s127
      %s128 = sphi 0, %s125
      %s129 = sphi 0, %s128
      %s145 = sphi 0, %s129
      %s151 = sphi 0, %s153
      %s154 = sphi 0, %s151
      %s155 = sphi 0, %s154
      %s171 = sphi 0, %s155
      %s175 = sphi 0, %s175
      %s177 = sphi 0, %s175
      %s178 = sphi 0, %s177
      %s192 = sphi 0, %s178
      %s196 = sphi 0, %s196
      %s198 = sphi 0, %s196
      %s199 = sphi 0, %s198
      %s213 = sphi 0, %s199
      %s217 = sphi 0, %s217
      %s219 = sphi 0, %s217
      %s220 = sphi 0, %s219
      %s234 = sphi 0, %s220
      %s238 = sphi 0, %s238
      %s240 = sphi 0, %s238
      %s241 = sphi 0, %s240
      %s255 = sphi 0, %s241
      %s261 = sphi 0, %s263
      %s264 = sphi 0, %s261
      %s265 = sphi 0, %s264
      %s281 = sphi 0, %s265
    $region4: #{tpu_custom_call.1} parent=1 // loop_header_branch
      %34 = sbr.rel (%p32) target = $region8
    $region5: #{tpu_custom_call.1} parent=1 // loop_body
      %s36 = ssub.s32 %s31, 1
      %s37 = ssub.s32 %s31, 2
      %s38 = sadd.s32 %s31, 1
      %s39 = sld [smem:[#allocation3 + %s31]]
      %s40 = sld [smem:[#allocation3 + %s38]]
      %s41 = ssub.s32 %s39, %s40
      %p42 = scmp.eq.s32.totalorder %s41, 0
      %s44 = sadd.s32 %s43, 1
      %s45 = scalar_select %p42, %s43, %s44
      %p48 = pneg %p42
      %p49 = scmp.eq.s32.totalorder %s31, 1
      %p50 = por %p48, %p49
      %p51 = scmp.ne.s32.totalorder %s43, %s46
      %p52 = scmp.eq.s32.totalorder %s31, 0
      %p53 = por %p51, %p52
      %p54 = scmp.ne.s32.totalorder %s43, %s46
      %p55 = scmp.eq.s32.totalorder %s36, 1
      %p56 = por %p54, %p55
      %p57 = scmp.ne.s32.totalorder %s46, %s47
      %p58 = scmp.eq.s32.totalorder %s36, 0
      %p59 = por %p57, %p58
      %p60 = scmp.ne.s32.totalorder %s46, %s47
      %p61 = scmp.eq.s32.totalorder %s37, 1
      %p62 = por %p60, %p61
      %p64 = scmp.ne.s32.totalorder %s47, %s63
      %p65 = scmp.eq.s32.totalorder %s37, 0
      %p66 = por %p64, %p65
      %s67 = sld [smem:[#allocation3 + %s31]]
      %s68 = sld [smem:[#allocation3 + %s38]]
      %s69 = ssub.s32 %s67, %s68
      %p70 = scmp.eq.s32.totalorder %s69, 0
      %s72 = sadd.s32 %s71, 1
      %s73 = scalar_select %p70, %s71, %s72
      %p76 = pneg %p70
      %p77 = scmp.eq.s32.totalorder %s31, 1
      %p78 = por %p76, %p77
      %p79 = scmp.ne.s32.totalorder %s71, %s74
      %p80 = scmp.eq.s32.totalorder %s31, 0
      %p81 = por %p79, %p80
      %p82 = scmp.ne.s32.totalorder %s71, %s74
      %p83 = scmp.eq.s32.totalorder %s36, 1
      %p84 = por %p82, %p83
      %p85 = scmp.ne.s32.totalorder %s74, %s75
      %p86 = scmp.eq.s32.totalorder %s36, 0
      %p87 = por %p85, %p86
      %p88 = scmp.ne.s32.totalorder %s74, %s75
      %p89 = scmp.eq.s32.totalorder %s37, 1
      %p90 = por %p88, %p89
      %p92 = scmp.ne.s32.totalorder %s75, %s91
      %p93 = scmp.eq.s32.totalorder %s37, 0
      %p94 = por %p92, %p93
      %s95 = sld [smem:[#allocation3 + %s31]]
      %s96 = sld [smem:[#allocation3 + %s38]]
      %s97 = ssub.s32 %s95, %s96
      %p98 = scmp.eq.s32.totalorder %s97, 0
      %s100 = sadd.s32 %s99, 1
      %s101 = scalar_select %p98, %s99, %s100
      %p104 = pneg %p98
      %p105 = scmp.eq.s32.totalorder %s31, 1
      %p106 = por %p104, %p105
      %p107 = scmp.ne.s32.totalorder %s99, %s102
      %p108 = scmp.eq.s32.totalorder %s31, 0
      %p109 = por %p107, %p108
      %p110 = scmp.ne.s32.totalorder %s99, %s102
      %p111 = scmp.eq.s32.totalorder %s36, 1
      %p112 = por %p110, %p111
      %p113 = scmp.ne.s32.totalorder %s102, %s103
      %p114 = scmp.eq.s32.totalorder %s36, 0
      %p115 = por %p113, %p114
      %p116 = scmp.ne.s32.totalorder %s102, %s103
      %p117 = scmp.eq.s32.totalorder %s37, 1
      %p118 = por %p116, %p117
      %p120 = scmp.ne.s32.totalorder %s103, %s119
      %p121 = scmp.eq.s32.totalorder %s37, 0
      %p122 = por %p120, %p121
      %s123 = ssub.s32 %s31, %s38
      %p124 = scmp.eq.s32.totalorder %s123, 0
      %s126 = sadd.s32 %s125, 1
      %s127 = scalar_select %p124, %s125, %s126
      %p130 = pneg %p124
      %p131 = scmp.eq.s32.totalorder %s31, 1
      %p132 = por %p130, %p131
      %p133 = scmp.ne.s32.totalorder %s125, %s128
      %p134 = scmp.eq.s32.totalorder %s31, 0
      %p135 = por %p133, %p134
      %p136 = scmp.ne.s32.totalorder %s125, %s128
      %p137 = scmp.eq.s32.totalorder %s36, 1
      %p138 = por %p136, %p137
      %p139 = scmp.ne.s32.totalorder %s128, %s129
      %p140 = scmp.eq.s32.totalorder %s36, 0
      %p141 = por %p139, %p140
      %p142 = scmp.ne.s32.totalorder %s128, %s129
      %p143 = scmp.eq.s32.totalorder %s37, 1
      %p144 = por %p142, %p143
      %p146 = scmp.ne.s32.totalorder %s129, %s145
      %p147 = scmp.eq.s32.totalorder %s37, 0
      %p148 = por %p146, %p147
      %s149 = ssub.s32 %s31, %s38
      %p150 = scmp.eq.s32.totalorder %s149, 0
      %s152 = sadd.s32 %s151, 1
      %s153 = scalar_select %p150, %s151, %s152
      %p156 = pneg %p150
      %p157 = scmp.eq.s32.totalorder %s31, 1
      %p158 = por %p156, %p157
      %p159 = scmp.ne.s32.totalorder %s151, %s154
      %p160 = scmp.eq.s32.totalorder %s31, 0
      %p161 = por %p159, %p160
      %p162 = scmp.ne.s32.totalorder %s151, %s154
      %p163 = scmp.eq.s32.totalorder %s36, 1
      %p164 = por %p162, %p163
      %p165 = scmp.ne.s32.totalorder %s154, %s155
      %p166 = scmp.eq.s32.totalorder %s36, 0
      %p167 = por %p165, %p166
      %p168 = scmp.ne.s32.totalorder %s154, %s155
      %p169 = scmp.eq.s32.totalorder %s37, 1
      %p170 = por %p168, %p169
      %p172 = scmp.ne.s32.totalorder %s155, %s171
      %p173 = scmp.eq.s32.totalorder %s37, 0
      %p174 = por %p172, %p173
      %s176 = sadd.s32 %s175, 1
      %p179 = scmp.eq.s32.totalorder %s31, 1
      %p180 = scmp.ne.s32.totalorder %s175, %s177
      %p181 = scmp.eq.s32.totalorder %s31, 0
      %p182 = por %p180, %p181
      %p183 = scmp.ne.s32.totalorder %s175, %s177
      %p184 = scmp.eq.s32.totalorder %s36, 1
      %p185 = por %p183, %p184
      %p186 = scmp.ne.s32.totalorder %s177, %s178
      %p187 = scmp.eq.s32.totalorder %s36, 0
      %p188 = por %p186, %p187
      %p189 = scmp.ne.s32.totalorder %s177, %s178
      %p190 = scmp.eq.s32.totalorder %s37, 1
      %p191 = por %p189, %p190
      %p193 = scmp.ne.s32.totalorder %s178, %s192
      %p194 = scmp.eq.s32.totalorder %s37, 0
      %p195 = por %p193, %p194
      %s197 = sadd.s32 %s196, 1
      %p200 = scmp.eq.s32.totalorder %s31, 1
      %p201 = scmp.ne.s32.totalorder %s196, %s198
      %p202 = scmp.eq.s32.totalorder %s31, 0
      %p203 = por %p201, %p202
      %p204 = scmp.ne.s32.totalorder %s196, %s198
      %p205 = scmp.eq.s32.totalorder %s36, 1
      %p206 = por %p204, %p205
      %p207 = scmp.ne.s32.totalorder %s198, %s199
      %p208 = scmp.eq.s32.totalorder %s36, 0
      %p209 = por %p207, %p208
      %p210 = scmp.ne.s32.totalorder %s198, %s199
      %p211 = scmp.eq.s32.totalorder %s37, 1
      %p212 = por %p210, %p211
      %p214 = scmp.ne.s32.totalorder %s199, %s213
      %p215 = scmp.eq.s32.totalorder %s37, 0
      %p216 = por %p214, %p215
      %s218 = sadd.s32 %s217, 1
      %p221 = scmp.eq.s32.totalorder %s31, 1
      %p222 = scmp.ne.s32.totalorder %s217, %s219
      %p223 = scmp.eq.s32.totalorder %s31, 0
      %p224 = por %p222, %p223
      %p225 = scmp.ne.s32.totalorder %s217, %s219
      %p226 = scmp.eq.s32.totalorder %s36, 1
      %p227 = por %p225, %p226
      %p228 = scmp.ne.s32.totalorder %s219, %s220
      %p229 = scmp.eq.s32.totalorder %s36, 0
      %p230 = por %p228, %p229
      %p231 = scmp.ne.s32.totalorder %s219, %s220
      %p232 = scmp.eq.s32.totalorder %s37, 1
      %p233 = por %p231, %p232
      %p235 = scmp.ne.s32.totalorder %s220, %s234
      %p236 = scmp.eq.s32.totalorder %s37, 0
      %p237 = por %p235, %p236
      %s239 = sadd.s32 %s238, 1
      %p242 = scmp.eq.s32.totalorder %s31, 1
      %p243 = scmp.ne.s32.totalorder %s238, %s240
      %p244 = scmp.eq.s32.totalorder %s31, 0
      %p245 = por %p243, %p244
      %p246 = scmp.ne.s32.totalorder %s238, %s240
      %p247 = scmp.eq.s32.totalorder %s36, 1
      %p248 = por %p246, %p247
      %p249 = scmp.ne.s32.totalorder %s240, %s241
      %p250 = scmp.eq.s32.totalorder %s36, 0
      %p251 = por %p249, %p250
      %p252 = scmp.ne.s32.totalorder %s240, %s241
      %p253 = scmp.eq.s32.totalorder %s37, 1
      %p254 = por %p252, %p253
      %p256 = scmp.ne.s32.totalorder %s241, %s255
      %p257 = scmp.eq.s32.totalorder %s37, 0
      %p258 = por %p256, %p257
      %s259 = ssub.s32 %s31, %s38
      %p260 = scmp.eq.s32.totalorder %s259, 0
      %s262 = sadd.s32 %s261, 1
      %s263 = scalar_select %p260, %s261, %s262
      %p266 = pneg %p260
      %p267 = scmp.eq.s32.totalorder %s31, 1
      %p268 = por %p266, %p267
      %p269 = scmp.ne.s32.totalorder %s261, %s264
      %p270 = scmp.eq.s32.totalorder %s31, 0
      %p271 = por %p269, %p270
      %p272 = scmp.ne.s32.totalorder %s261, %s264
      %p273 = scmp.eq.s32.totalorder %s36, 1
      %p274 = por %p272, %p273
      %p275 = scmp.ne.s32.totalorder %s264, %s265
      %p276 = scmp.eq.s32.totalorder %s36, 0
      %p277 = por %p275, %p276
      %p278 = scmp.ne.s32.totalorder %s264, %s265
      %p279 = scmp.eq.s32.totalorder %s37, 1
      %p280 = por %p278, %p279
      %p282 = scmp.ne.s32.totalorder %s265, %s281
      %p283 = scmp.eq.s32.totalorder %s37, 0
      %p284 = por %p282, %p283
      %p285 = scmp.le.s32.totalorder 1, %s31
      %p286 = scmp.lt.s32.totalorder %s31, 3
      %p287 = pnand %p285, %p286
      %p288 = pneg %p287
      // Predicated region
      $region9: #{tpu_custom_call.1} parent=5 // pred_check
        _
      $region10: #{tpu_custom_call.1} parent=5 // pred_check_branch
        %290 = sbr.rel (%p287) target = $region12
      $region11: #{tpu_custom_call.1} parent=5 // pred_region
        %s291 = ssub.s32 %s31, 1
        // Predicated region
        $region13: #{tpu_custom_call.1} parent=11 // pred_check
          %p292 = pneg %p188
        $region14: #{tpu_custom_call.1} parent=11 // pred_check_branch
          %294 = sbr.rel (%p292) target = $region16
        $region15: #{tpu_custom_call.1} parent=11 // pred_region
          _
        $region16: #{tpu_custom_call.1} parent=11 // pred_fallthru
          _
        // Predicated region
        $region17: #{tpu_custom_call.1} parent=11 // pred_check
          %p295 = pneg %p209
        $region18: #{tpu_custom_call.1} parent=11 // pred_check_branch
          %297 = sbr.rel (%p295) target = $region20
        $region19: #{tpu_custom_call.1} parent=11 // pred_region
          _
        $region20: #{tpu_custom_call.1} parent=11 // pred_fallthru
          _
        // Predicated region
        $region21: #{tpu_custom_call.1} parent=11 // pred_check
          %p298 = pneg %p230
        $region22: #{tpu_custom_call.1} parent=11 // pred_check_branch
          %300 = sbr.rel (%p298) target = $region24
        $region23: #{tpu_custom_call.1} parent=11 // pred_region
          _
        $region24: #{tpu_custom_call.1} parent=11 // pred_fallthru
          _
        // Predicated region
        $region25: #{tpu_custom_call.1} parent=11 // pred_check
          %p301 = pneg %p251
        $region26: #{tpu_custom_call.1} parent=11 // pred_check_branch
          %303 = sbr.rel (%p301) target = $region28
        $region27: #{tpu_custom_call.1} parent=11 // pred_region
          _
        $region28: #{tpu_custom_call.1} parent=11 // pred_fallthru
          _
      $region12: #{tpu_custom_call.1} parent=5 // pred_fallthru
        _
      %p304 = scmp.lt.s32.totalorder %s31, 2
      // Predicated region
      $region29: #{tpu_custom_call.1} parent=5 // pred_check
        %p305 = pneg %p304
      $region30: #{tpu_custom_call.1} parent=5 // pred_check_branch
        %307 = sbr.rel (%p305) target = $region32
      $region31: #{tpu_custom_call.1} parent=5 // pred_region
        // Predicated region
        $region33: #{tpu_custom_call.1} parent=31 // pred_check
          %p308 = pneg %p53
        $region34: #{tpu_custom_call.1} parent=31 // pred_check_branch
          %310 = sbr.rel (%p308) target = $region36
        $region35: #{tpu_custom_call.1} parent=31 // pred_region
          %s311 = sand.u32 %s43, 1
          %s312 = scalar_lea.sflag [#allocation5], %s311
          %s313 = sand.u32 %s43, 1
          %s314 = smul.addr %s313, 16
          %s315 = scalar_lea.vmem [#allocation4], %s314
          %s316 = sld [smem:[#allocation3 + %s31]]
          %s318 = ssub.s32 256, 256
          %319 = vsyncadd %s312, %s318
          %s320 = smul.addr %s316, 2
          %s321 = smul.addr %s320, 128
          %s322 = scalar_lea.hbm %s1, %s321
          %s323 = sshll.u32 %s315, 4
          %s324 = int_to_ptr.vmem [resolvable:$true] %s323
          %329 = dma.hbm_to_vmem [thread:$0]  %s322, 256, %s324, %s312, 128, 128, 8
        $region36: #{tpu_custom_call.1} parent=31 // pred_fallthru
          _
        // Predicated region
        $region37: #{tpu_custom_call.1} parent=31 // pred_check
          %p330 = pneg %p81
        $region38: #{tpu_custom_call.1} parent=31 // pred_check_branch
          %332 = sbr.rel (%p330) target = $region40
        $region39: #{tpu_custom_call.1} parent=31 // pred_region
          %s333 = sand.u32 %s31, 1
          %s334 = scalar_lea.sflag [#allocation8], %s333
          %s335 = sand.u32 %s71, 1
          %s336 = smul.addr %s335, 16
          %s337 = scalar_lea.vmem [#allocation7], %s336
          %s338 = sld [smem:[#allocation3 + %s31]]
          %s340 = ssub.s32 256, 256
          %341 = vsyncadd %s334, %s340
          %s342 = smul.addr %s338, 2
          %s343 = smul.addr %s342, 128
          %s344 = scalar_lea.hbm %s2, %s343
          %s345 = sshll.u32 %s337, 4
          %s346 = int_to_ptr.vmem [resolvable:$true] %s345
          %351 = dma.hbm_to_vmem [thread:$0]  %s344, 256, %s346, %s334, 128, 128, 8
        $region40: #{tpu_custom_call.1} parent=31 // pred_fallthru
          _
        // Predicated region
        $region41: #{tpu_custom_call.1} parent=31 // pred_check
          %p352 = pneg %p109
        $region42: #{tpu_custom_call.1} parent=31 // pred_check_branch
          %354 = sbr.rel (%p352) target = $region44
        $region43: #{tpu_custom_call.1} parent=31 // pred_region
          %s355 = sld [smem:[#allocation3 + %s31]]
          %p356 = scmp.lt.s32.totalorder %s355, 4
          %s357 = scalar_select %p356, %s355, 4
          %s358 = scalar_lea.vmem %s3, %s357
          %s359 = sld [smem:[#allocation3 + %s31]]
        $region44: #{tpu_custom_call.1} parent=31 // pred_fallthru
          _
        // Predicated region
        $region45: #{tpu_custom_call.1} parent=31 // pred_check
          %p360 = pneg %p135
        $region46: #{tpu_custom_call.1} parent=31 // pred_check_branch
          %362 = sbr.rel (%p360) target = $region48
        $region47: #{tpu_custom_call.1} parent=31 // pred_region
          %s363 = sand.u32 %s31, 1
          %s364 = scalar_lea.sflag [#allocation8], %s363
          %s365 = sand.u32 %s125, 1
          %s366 = smul.addr %s365, 64
          %s367 = scalar_lea.vmem [#allocation9], %s366
          %s369 = ssub.s32 1024, 1024
          %370 = vsyncadd %s364, %s369
          %s371 = smul.addr %s31, 8
          %s372 = smul.addr %s371, 128
          %s373 = scalar_lea.hbm %s4, %s372
          %s374 = sshll.u32 %s367, 4
          %s375 = int_to_ptr.vmem [resolvable:$true] %s374
          %380 = dma.hbm_to_vmem [thread:$0]  %s373, 1024, %s375, %s364, 128, 128, 8
        $region48: #{tpu_custom_call.1} parent=31 // pred_fallthru
          _
        // Predicated region
        $region49: #{tpu_custom_call.1} parent=31 // pred_check
          %p381 = pneg %p161
        $region50: #{tpu_custom_call.1} parent=31 // pred_check_branch
          %383 = sbr.rel (%p381) target = $region52
        $region51: #{tpu_custom_call.1} parent=31 // pred_region
          %p384 = scmp.lt.s32.totalorder %s31, 1
          %s385 = scalar_select %p384, %s31, 1
          %s386 = smul.addr %s385, 2
          %s387 = smul.addr %s386, 4
          %s388 = scalar_lea.vmem %s5, %s387
        $region52: #{tpu_custom_call.1} parent=31 // pred_fallthru
          _
      $region32: #{tpu_custom_call.1} parent=5 // pred_fallthru
        _
      %p389 = scmp.le.s32.totalorder 1, %s31
      %p390 = scmp.lt.s32.totalorder %s31, 3
      %p391 = pnand %p389, %p390
      %p392 = pneg %p391
      // Predicated region
      $region53: #{tpu_custom_call.1} parent=5 // pred_check
        _
      $region54: #{tpu_custom_call.1} parent=5 // pred_check_branch
        %394 = sbr.rel (%p391) target = $region56
      $region55: #{tpu_custom_call.1} parent=5 // pred_region
        %s395 = ssub.s32 %s31, 1
        %s396 = sand.u32 %s46, 1
        %s397 = scalar_lea.sflag [#allocation5], %s396
        %s398 = sand.u32 %s46, 1
        %s399 = smul.addr %s398, 16
        %s400 = scalar_lea.vmem [#allocation4], %s399
        // Predicated region
        $region57: #{tpu_custom_call.1} parent=55 // pred_check
          %p401 = pneg %p59
        $region58: #{tpu_custom_call.1} parent=55 // pred_check_branch
          %403 = sbr.rel (%p401) target = $region60
        $region59: #{tpu_custom_call.1} parent=55 // pred_region
          %404 = dma.done %s397, 256
        $region60: #{tpu_custom_call.1} parent=55 // pred_fallthru
          _
        %s405 = sand.u32 %s36, 1
        %s406 = scalar_lea.sflag [#allocation8], %s405
        %s407 = sand.u32 %s74, 1
        %s408 = smul.addr %s407, 16
        %s409 = scalar_lea.vmem [#allocation7], %s408
        // Predicated region
        $region61: #{tpu_custom_call.1} parent=55 // pred_check
          %p410 = pneg %p87
        $region62: #{tpu_custom_call.1} parent=55 // pred_check_branch
          %412 = sbr.rel (%p410) target = $region64
        $region63: #{tpu_custom_call.1} parent=55 // pred_region
          %413 = dma.done %s406, 256
        $region64: #{tpu_custom_call.1} parent=55 // pred_fallthru
          _
        %s414 = sand.u32 %s36, 1
        %s415 = scalar_lea.sflag [#allocation8], %s414
        %s416 = sand.u32 %s128, 1
        %s417 = smul.addr %s416, 64
        %s418 = scalar_lea.vmem [#allocation9], %s417
        // Predicated region
        $region65: #{tpu_custom_call.1} parent=55 // pred_check
          %p419 = pneg %p141
        $region66: #{tpu_custom_call.1} parent=55 // pred_check_branch
          %421 = sbr.rel (%p419) target = $region68
        $region67: #{tpu_custom_call.1} parent=55 // pred_region
          %422 = dma.done %s415, 1024
        $region68: #{tpu_custom_call.1} parent=55 // pred_fallthru
          _
        %s423 = sand.u32 %s46, 1
        %s424 = scalar_lea.sflag [#allocation5], %s423
        %s425 = sand.u32 %s46, 1
        %s426 = smul.addr %s425, 16
        %s427 = scalar_lea.vmem [#allocation4], %s426
        %p428 = pneg %p59
        %p429 = pneg %p56
        %s430 = sand.u32 %s36, 1
        %s431 = scalar_lea.sflag [#allocation8], %s430
        %s432 = sand.u32 %s74, 1
        %s433 = smul.addr %s432, 16
        %s434 = scalar_lea.vmem [#allocation7], %s433
        %p435 = pneg %p87
        %p436 = pneg %p84
        %s437 = sld [smem:[#allocation3 + %s36]]
        %p438 = scmp.lt.s32.totalorder %s437, 4
        %s439 = scalar_select %p438, %s437, 4
        %s440 = scalar_lea.vmem %s3, %s439
        %p441 = pneg %p115
        %p442 = pneg %p112
        %s443 = sand.u32 %s36, 1
        %s444 = scalar_lea.sflag [#allocation8], %s443
        %s445 = sand.u32 %s128, 1
        %s446 = smul.addr %s445, 64
        %s447 = scalar_lea.vmem [#allocation9], %s446
        %p448 = pneg %p141
        %p449 = pneg %p138
        %p450 = scmp.lt.s32.totalorder %s36, 1
        %s451 = scalar_select %p450, %s36, 1
        %s452 = smul.addr %s451, 2
        %s453 = smul.addr %s452, 4
        %s454 = scalar_lea.vmem %s5, %s453
        %p455 = pneg %p167
        %p456 = pneg %p164
        %p457 = pneg %p188
        %p458 = pneg %p185
        %p459 = pneg %p209
        %p460 = pneg %p206
        %p461 = pneg %p230
        %p462 = pneg %p227
        %p463 = pneg %p251
        %p464 = pneg %p248
        %p465 = pneg %p277
        %p466 = pneg %p274
        %s467 = sand.u32 %s264, 1
        %s468 = scalar_lea.sflag [#allocation6], %s467
        %s469 = sand.u32 %s264, 1
        %s470 = scalar_lea.vmem [#allocation10], %s469
        %s471 = sld [smem:[#allocation3 + %s36]]
        %s472 = sld [smem:[#allocation3 + %s36]]
        %s473 = sld [smem:[#allocation3 + %s36]]
        %p474 = scmp.lt.s32.totalorder %s473, 4
        %s475 = scalar_select %p474, %s473, 4
        %s476 = scalar_lea.vmem %s3, %s475
        %s477 = sld [smem:[#allocation3 + %s36]]
        %p478 = scmp.lt.s32.totalorder %s36, 1
        %s479 = scalar_select %p478, %s36, 1
        %s480 = smul.addr %s479, 2
        %s481 = smul.addr %s480, 4
        %s482 = scalar_lea.vmem %s5, %s481
        %v483 = vld [vmem:[%s400] sm:$0xff]
        %v484 = vld [vmem:[%s400 + $0x8] sm:$0xff]
        %v485 = vld [vmem:[%s409] sm:$0xff]
        %v486 = vld [vmem:[%s409 + $0x8] sm:$0xff]
        %v487 = vld [vmem:[%s418] sm:$0xff]
        %v488 = vld [vmem:[%s418 + $0x8] sm:$0xff]
        %v489 = vld [vmem:[%s418 + $0x10] sm:$0xff]
        %v490 = vld [vmem:[%s418 + $0x18] sm:$0xff]
        %v491 = vld [vmem:[%s418 + $0x20] sm:$0xff]
        %v492 = vld [vmem:[%s418 + $0x28] sm:$0xff]
        %v493 = vld [vmem:[%s418 + $0x30] sm:$0xff]
        %v494 = vld [vmem:[%s418 + $0x38] sm:$0xff]
        %v495 = vld [vmem:[%s482] sm:$0xff]
        %vm496 = vcmask 130048
        %v498 = vsel %vm496, %v483, 0
        %v501 = vsel %vm496, %v484, 0
        %503 = vmatprep.subr.mxu0 0.0
        %504 = vmatpush1.msra.mxu0 %v487
        %505 = vmatprep.subr.mxu0 0.0
        %506 = vmatpush1.msra.mxu0 %v488
        %507 = vmatprep.subr.mxu0 0.0
        %508 = vmatpush1.msra.mxu0 0.0
        %509 = vmatprep.subr.mxu0 0.0
        %510 = vmatpush1.msra.mxu0 0.0
        %511 = vmatprep.subr.mxu0 0.0
        %512 = vmatpush1.msra.mxu0 0.0
        %513 = vmatprep.subr.mxu0 0.0
        %514 = vmatpush1.msra.mxu0 0.0
        %515 = vmatprep.subr.mxu0 0.0
        %516 = vmatpush1.msra.mxu0 0.0
        %517 = vmatprep.subr.mxu0 0.0
        %518 = vmatpush1.msra.mxu0 0.0
        %519 = vmatprep.subr.mxu0 0.0
        %520 = vmatpush1.msra.mxu0 0.0
        %521 = vmatprep.subr.mxu0 0.0
        %522 = vmatpush1.msra.mxu0 0.0
        %523 = vmatprep.subr.mxu0 0.0
        %524 = vmatpush1.msra.mxu0 0.0
        %525 = vmatprep.subr.mxu0 0.0
        %526 = vmatpush1.msra.mxu0 0.0
        %527 = vmatprep.subr.mxu0 0.0
        %528 = vmatpush1.msra.mxu0 0.0
        %529 = vmatprep.subr.mxu0 0.0
        %530 = vmatpush1.msra.mxu0 0.0
        %531 = vmatprep.subr.mxu0 0.0
        %532 = vmatpush1.msra.mxu0 0.0
        %533 = vmatprep.subr.mxu0 0.0
        %534 = vmatpush1.msra.mxu0 0.0
        %535 = vmatprep.subr.mxu0 0.0
        %536 = vmatpush1.msra.mxu0 0.0
        %537 = vmatprep.subr.mxu0 0.0
        %538 = vmatpush1.msra.mxu0 0.0
        %539 = vmatprep.subr.mxu0 0.0
        %540 = vmatpush1.msra.mxu0 0.0
        %541 = vmatprep.subr.mxu0 0.0
        %542 = vmatpush1.msra.mxu0 0.0
        %543 = vmatprep.subr.mxu0 0.0
        %544 = vmatpush1.msra.mxu0 0.0
        %545 = vmatprep.subr.mxu0 0.0
        %546 = vmatpush1.msra.mxu0 0.0
        %547 = vmatprep.subr.mxu0 0.0
        %548 = vmatpush1.msra.mxu0 0.0
        %549 = vmatprep.subr.mxu0 0.0
        %550 = vmatpush1.msra.mxu0 0.0
        %551 = vmatprep.subr.mxu0 0.0
        %552 = vmatpush1.msra.mxu0 0.0
        %553 = vmatprep.subr.mxu0 0.0
        %554 = vmatpush1.msra.mxu0 0.0
        %555 = vmatprep.subr.mxu0 0.0
        %556 = vmatpush1.msra.mxu0 0.0
        %557 = vmatprep.subr.mxu0 0.0
        %558 = vmatpush1.msra.mxu0 0.0
        %559 = vmatprep.subr.mxu0 0.0
        %560 = vmatpush1.msra.mxu0 0.0
        %561 = vmatprep.subr.mxu0 0.0
        %562 = vmatpush1.msra.mxu0 0.0
        %563 = vmatprep.subr.mxu0 0.0
        %564 = vmatpush1.msra.mxu0 0.0
        %565 = vmatprep.subr.mxu0 0.0
        %566 = vmatpush1.msra.mxu0 0.0
        %567 = vmatprep.mubr.f32.mxu0 0.0
        %568 = vmatmul.mubr.f32.gmra.mrb[0].mxu0 %v498
        %v569 = vpop.f32.mrb[0].mxu0
        %v570 = vadd.f32 0.0, %v569
        %v571 = vpop.f32.mrb[0].mxu0
        %572 = vmatprep.mubr.f32.mxu0 0.0
        %573 = vmatmul.mubr.f32.gmra.mrb[0].mxu0 %v501
        %v574 = vpop.f32.mrb[0].mxu0
        %v575 = vadd.f32 0.0, %v574
        %v576 = vpop.f32.mrb[0].mxu0
        %577 = vdwg.mxu0
        %578 = vmatprep.subr.mxu0 0.0
        %579 = vmatpush1.msra.mxu0 %v489
        %580 = vmatprep.subr.mxu0 0.0
        %581 = vmatpush1.msra.mxu0 %v490
        %582 = vmatprep.subr.mxu0 0.0
        %583 = vmatpush1.msra.mxu0 0.0
        %584 = vmatprep.subr.mxu0 0.0
        %585 = vmatpush1.msra.mxu0 0.0
        %586 = vmatprep.subr.mxu0 0.0
        %587 = vmatpush1.msra.mxu0 0.0
        %588 = vmatprep.subr.mxu0 0.0
        %589 = vmatpush1.msra.mxu0 0.0
        %590 = vmatprep.subr.mxu0 0.0
        %591 = vmatpush1.msra.mxu0 0.0
        %592 = vmatprep.subr.mxu0 0.0
        %593 = vmatpush1.msra.mxu0 0.0
        %594 = vmatprep.subr.mxu0 0.0
        %595 = vmatpush1.msra.mxu0 0.0
        %596 = vmatprep.subr.mxu0 0.0
        %597 = vmatpush1.msra.mxu0 0.0
        %598 = vmatprep.subr.mxu0 0.0
        %599 = vmatpush1.msra.mxu0 0.0
        %600 = vmatprep.subr.mxu0 0.0
        %601 = vmatpush1.msra.mxu0 0.0
        %602 = vmatprep.subr.mxu0 0.0
        %603 = vmatpush1.msra.mxu0 0.0
        %604 = vmatprep.subr.mxu0 0.0
        %605 = vmatpush1.msra.mxu0 0.0
        %606 = vmatprep.subr.mxu0 0.0
        %607 = vmatpush1.msra.mxu0 0.0
        %608 = vmatprep.subr.mxu0 0.0
        %609 = vmatpush1.msra.mxu0 0.0
        %610 = vmatprep.subr.mxu0 0.0
        %611 = vmatpush1.msra.mxu0 0.0
        %612 = vmatprep.subr.mxu0 0.0
        %613 = vmatpush1.msra.mxu0 0.0
        %614 = vmatprep.subr.mxu0 0.0
        %615 = vmatpush1.msra.mxu0 0.0
        %616 = vmatprep.subr.mxu0 0.0
        %617 = vmatpush1.msra.mxu0 0.0
        %618 = vmatprep.subr.mxu0 0.0
        %619 = vmatpush1.msra.mxu0 0.0
        %620 = vmatprep.subr.mxu0 0.0
        %621 = vmatpush1.msra.mxu0 0.0
        %622 = vmatprep.subr.mxu0 0.0
        %623 = vmatpush1.msra.mxu0 0.0
        %624 = vmatprep.subr.mxu0 0.0
        %625 = vmatpush1.msra.mxu0 0.0
        %626 = vmatprep.subr.mxu0 0.0
        %627 = vmatpush1.msra.mxu0 0.0
        %628 = vmatprep.subr.mxu0 0.0
        %629 = vmatpush1.msra.mxu0 0.0
        %630 = vmatprep.subr.mxu0 0.0
        %631 = vmatpush1.msra.mxu0 0.0
        %632 = vmatprep.subr.mxu0 0.0
        %633 = vmatpush1.msra.mxu0 0.0
        %634 = vmatprep.subr.mxu0 0.0
        %635 = vmatpush1.msra.mxu0 0.0
        %636 = vmatprep.subr.mxu0 0.0
        %637 = vmatpush1.msra.mxu0 0.0
        %638 = vmatprep.subr.mxu0 0.0
        %639 = vmatpush1.msra.mxu0 0.0
        %640 = vmatprep.subr.mxu0 0.0
        %641 = vmatpush1.msra.mxu0 0.0
        %642 = vmatprep.mubr.f32.mxu0 0.0
        %643 = vmatmul.mubr.f32.gmra.mrb[0].mxu0 %v498
        %v644 = vpop.f32.mrb[0].mxu0
        %v645 = vadd.f32 0.0, %v644
        %v646 = vpop.f32.mrb[0].mxu0
        %647 = vmatprep.mubr.f32.mxu0 0.0
        %648 = vmatmul.mubr.f32.gmra.mrb[0].mxu0 %v501
        %v649 = vpop.f32.mrb[0].mxu0
        %v650 = vadd.f32 0.0, %v649
        %v651 = vpop.f32.mrb[0].mxu0
        %652 = vdwg.mxu0
        %653 = vmatprep.subr.mxu0 0.0
        %654 = vmatpush1.msra.mxu0 %v491
        %655 = vmatprep.subr.mxu0 0.0
        %656 = vmatpush1.msra.mxu0 %v492
        %657 = vmatprep.subr.mxu0 0.0
        %658 = vmatpush1.msra.mxu0 0.0
        %659 = vmatprep.subr.mxu0 0.0
        %660 = vmatpush1.msra.mxu0 0.0
        %661 = vmatprep.subr.mxu0 0.0
        %662 = vmatpush1.msra.mxu0 0.0
        %663 = vmatprep.subr.mxu0 0.0
        %664 = vmatpush1.msra.mxu0 0.0
        %665 = vmatprep.subr.mxu0 0.0
        %666 = vmatpush1.msra.mxu0 0.0
        %667 = vmatprep.subr.mxu0 0.0
        %668 = vmatpush1.msra.mxu0 0.0
        %669 = vmatprep.subr.mxu0 0.0
        %670 = vmatpush1.msra.mxu0 0.0
        %671 = vmatprep.subr.mxu0 0.0
        %672 = vmatpush1.msra.mxu0 0.0
        %673 = vmatprep.subr.mxu0 0.0
        %674 = vmatpush1.msra.mxu0 0.0
        %675 = vmatprep.subr.mxu0 0.0
        %676 = vmatpush1.msra.mxu0 0.0
        %677 = vmatprep.subr.mxu0 0.0
        %678 = vmatpush1.msra.mxu0 0.0
        %679 = vmatprep.subr.mxu0 0.0
        %680 = vmatpush1.msra.mxu0 0.0
        %681 = vmatprep.subr.mxu0 0.0
        %682 = vmatpush1.msra.mxu0 0.0
        %683 = vmatprep.subr.mxu0 0.0
        %684 = vmatpush1.msra.mxu0 0.0
        %685 = vmatprep.subr.mxu0 0.0
        %686 = vmatpush1.msra.mxu0 0.0
        %687 = vmatprep.subr.mxu0 0.0
        %688 = vmatpush1.msra.mxu0 0.0
        %689 = vmatprep.subr.mxu0 0.0
        %690 = vmatpush1.msra.mxu0 0.0
        %691 = vmatprep.subr.mxu0 0.0
        %692 = vmatpush1.msra.mxu0 0.0
        %693 = vmatprep.subr.mxu0 0.0
        %694 = vmatpush1.msra.mxu0 0.0
        %695 = vmatprep.subr.mxu0 0.0
        %696 = vmatpush1.msra.mxu0 0.0
        %697 = vmatprep.subr.mxu0 0.0
        %698 = vmatpush1.msra.mxu0 0.0
        %699 = vmatprep.subr.mxu0 0.0
        %700 = vmatpush1.msra.mxu0 0.0
        %701 = vmatprep.subr.mxu0 0.0
        %702 = vmatpush1.msra.mxu0 0.0
        %703 = vmatprep.subr.mxu0 0.0
        %704 = vmatpush1.msra.mxu0 0.0
        %705 = vmatprep.subr.mxu0 0.0
        %706 = vmatpush1.msra.mxu0 0.0
        %707 = vmatprep.subr.mxu0 0.0
        %708 = vmatpush1.msra.mxu0 0.0
        %709 = vmatprep.subr.mxu0 0.0
        %710 = vmatpush1.msra.mxu0 0.0
        %711 = vmatprep.subr.mxu0 0.0
        %712 = vmatpush1.msra.mxu0 0.0
        %713 = vmatprep.subr.mxu0 0.0
        %714 = vmatpush1.msra.mxu0 0.0
        %715 = vmatprep.subr.mxu0 0.0
        %716 = vmatpush1.msra.mxu0 0.0
        %717 = vmatprep.mubr.f32.mxu0 0.0
        %718 = vmatmul.mubr.f32.gmra.mrb[0].mxu0 %v498
        %v719 = vpop.f32.mrb[0].mxu0
        %v720 = vadd.f32 0.0, %v719
        %v721 = vpop.f32.mrb[0].mxu0
        %722 = vmatprep.mubr.f32.mxu0 0.0
        %723 = vmatmul.mubr.f32.gmra.mrb[0].mxu0 %v501
        %v724 = vpop.f32.mrb[0].mxu0
        %v725 = vadd.f32 0.0, %v724
        %v726 = vpop.f32.mrb[0].mxu0
        %727 = vdwg.mxu0
        %728 = vmatprep.subr.mxu0 0.0
        %729 = vmatpush1.msra.mxu0 %v493
        %730 = vmatprep.subr.mxu0 0.0
        %731 = vmatpush1.msra.mxu0 %v494
        %732 = vmatprep.subr.mxu0 0.0
        %733 = vmatpush1.msra.mxu0 0.0
        %734 = vmatprep.subr.mxu0 0.0
        %735 = vmatpush1.msra.mxu0 0.0
        %736 = vmatprep.subr.mxu0 0.0
        %737 = vmatpush1.msra.mxu0 0.0
        %738 = vmatprep.subr.mxu0 0.0
        %739 = vmatpush1.msra.mxu0 0.0
        %740 = vmatprep.subr.mxu0 0.0
        %741 = vmatpush1.msra.mxu0 0.0
        %742 = vmatprep.subr.mxu0 0.0
        %743 = vmatpush1.msra.mxu0 0.0
        %744 = vmatprep.subr.mxu0 0.0
        %745 = vmatpush1.msra.mxu0 0.0
        %746 = vmatprep.subr.mxu0 0.0
        %747 = vmatpush1.msra.mxu0 0.0
        %748 = vmatprep.subr.mxu0 0.0
        %749 = vmatpush1.msra.mxu0 0.0
        %750 = vmatprep.subr.mxu0 0.0
        %751 = vmatpush1.msra.mxu0 0.0
        %752 = vmatprep.subr.mxu0 0.0
        %753 = vmatpush1.msra.mxu0 0.0
        %754 = vmatprep.subr.mxu0 0.0
        %755 = vmatpush1.msra.mxu0 0.0
        %756 = vmatprep.subr.mxu0 0.0
        %757 = vmatpush1.msra.mxu0 0.0
        %758 = vmatprep.subr.mxu0 0.0
        %759 = vmatpush1.msra.mxu0 0.0
        %760 = vmatprep.subr.mxu0 0.0
        %761 = vmatpush1.msra.mxu0 0.0
        %762 = vmatprep.subr.mxu0 0.0
        %763 = vmatpush1.msra.mxu0 0.0
        %764 = vmatprep.subr.mxu0 0.0
        %765 = vmatpush1.msra.mxu0 0.0
        %766 = vmatprep.subr.mxu0 0.0
        %767 = vmatpush1.msra.mxu0 0.0
        %768 = vmatprep.subr.mxu0 0.0
        %769 = vmatpush1.msra.mxu0 0.0
        %770 = vmatprep.subr.mxu0 0.0
        %771 = vmatpush1.msra.mxu0 0.0
        %772 = vmatprep.subr.mxu0 0.0
        %773 = vmatpush1.msra.mxu0 0.0
        %774 = vmatprep.subr.mxu0 0.0
        %775 = vmatpush1.msra.mxu0 0.0
        %776 = vmatprep.subr.mxu0 0.0
        %777 = vmatpush1.msra.mxu0 0.0
        %778 = vmatprep.subr.mxu0 0.0
        %779 = vmatpush1.msra.mxu0 0.0
        %780 = vmatprep.subr.mxu0 0.0
        %781 = vmatpush1.msra.mxu0 0.0
        %782 = vmatprep.subr.mxu0 0.0
        %783 = vmatpush1.msra.mxu0 0.0
        %784 = vmatprep.subr.mxu0 0.0
        %785 = vmatpush1.msra.mxu0 0.0
        %786 = vmatprep.subr.mxu0 0.0
        %787 = vmatpush1.msra.mxu0 0.0
        %788 = vmatprep.subr.mxu0 0.0
        %789 = vmatpush1.msra.mxu0 0.0
        %790 = vmatprep.subr.mxu0 0.0
        %791 = vmatpush1.msra.mxu0 0.0
        %792 = vmatprep.mubr.f32.mxu0 0.0
        %793 = vmatmul.mubr.f32.gmra.mrb[0].mxu0 %v498
        %v794 = vpop.f32.mrb[0].mxu0
        %v795 = vadd.f32 0.0, %v794
        %v796 = vpop.f32.mrb[0].mxu0
        %797 = vmatprep.mubr.f32.mxu0 0.0
        %798 = vmatmul.mubr.f32.gmra.mrb[0].mxu0 %v501
        %v799 = vpop.f32.mrb[0].mxu0
        %v800 = vadd.f32 0.0, %v799
        %v801 = vpop.f32.mrb[0].mxu0
        %802 = vdwg.mxu0
        %v804 = vsel %vm496, %v570, 0
        %v807 = vsel %vm496, %v575, 0
        %809 = vmatprep.subr.mxu0 0.0
        %810 = vmatpush1.msra.mxu0 %v485
        %811 = vmatprep.subr.mxu0 0.0
        %812 = vmatpush1.msra.mxu0 %v486
        %813 = vmatprep.subr.mxu0 0.0
        %814 = vmatpush1.msra.mxu0 0.0
        %815 = vmatprep.subr.mxu0 0.0
        %816 = vmatpush1.msra.mxu0 0.0
        %817 = vmatprep.subr.mxu0 0.0
        %818 = vmatpush1.msra.mxu0 0.0
        %819 = vmatprep.subr.mxu0 0.0
        %820 = vmatpush1.msra.mxu0 0.0
        %821 = vmatprep.subr.mxu0 0.0
        %822 = vmatpush1.msra.mxu0 0.0
        %823 = vmatprep.subr.mxu0 0.0
        %824 = vmatpush1.msra.mxu0 0.0
        %825 = vmatprep.subr.mxu0 0.0
        %826 = vmatpush1.msra.mxu0 0.0
        %827 = vmatprep.subr.mxu0 0.0
        %828 = vmatpush1.msra.mxu0 0.0
        %829 = vmatprep.subr.mxu0 0.0
        %830 = vmatpush1.msra.mxu0 0.0
        %831 = vmatprep.subr.mxu0 0.0
        %832 = vmatpush1.msra.mxu0 0.0
        %833 = vmatprep.subr.mxu0 0.0
        %834 = vmatpush1.msra.mxu0 0.0
        %835 = vmatprep.subr.mxu0 0.0
        %836 = vmatpush1.msra.mxu0 0.0
        %837 = vmatprep.subr.mxu0 0.0
        %838 = vmatpush1.msra.mxu0 0.0
        %839 = vmatprep.subr.mxu0 0.0
        %840 = vmatpush1.msra.mxu0 0.0
        %841 = vmatprep.subr.mxu0 0.0
        %842 = vmatpush1.msra.mxu0 0.0
        %843 = vmatprep.subr.mxu0 0.0
        %844 = vmatpush1.msra.mxu0 0.0
        %845 = vmatprep.subr.mxu0 0.0
        %846 = vmatpush1.msra.mxu0 0.0
        %847 = vmatprep.subr.mxu0 0.0
        %848 = vmatpush1.msra.mxu0 0.0
        %849 = vmatprep.subr.mxu0 0.0
        %850 = vmatpush1.msra.mxu0 0.0
        %851 = vmatprep.subr.mxu0 0.0
        %852 = vmatpush1.msra.mxu0 0.0
        %853 = vmatprep.subr.mxu0 0.0
        %854 = vmatpush1.msra.mxu0 0.0
        %855 = vmatprep.subr.mxu0 0.0
        %856 = vmatpush1.msra.mxu0 0.0
        %857 = vmatprep.subr.mxu0 0.0
        %858 = vmatpush1.msra.mxu0 0.0
        %859 = vmatprep.subr.mxu0 0.0
        %860 = vmatpush1.msra.mxu0 0.0
        %861 = vmatprep.subr.mxu0 0.0
        %862 = vmatpush1.msra.mxu0 0.0
        %863 = vmatprep.subr.mxu0 0.0
        %864 = vmatpush1.msra.mxu0 0.0
        %865 = vmatprep.subr.mxu0 0.0
        %866 = vmatpush1.msra.mxu0 0.0
        %867 = vmatprep.subr.mxu0 0.0
        %868 = vmatpush1.msra.mxu0 0.0
        %869 = vmatprep.subr.mxu0 0.0
        %870 = vmatpush1.msra.mxu0 0.0
        %871 = vmatprep.subr.mxu0 0.0
        %872 = vmatpush1.msra.mxu0 0.0
        %873 = vmatprep.mubr.f32.mxu0 0.0
        %874 = vmatmul.mubr.f32.gmra.mrb[0].mxu0 %v804
        %v875 = vpop.f32.mrb[0].mxu0
        %v876 = vadd.f32 0.0, %v875
        %v877 = vpop.f32.mrb[0].mxu0
        %878 = vmatprep.mubr.f32.mxu0 0.0
        %879 = vmatmul.mubr.f32.gmra.mrb[0].mxu0 %v807
        %v880 = vpop.f32.mrb[0].mxu0
        %v881 = vadd.f32 0.0, %v880
        %v882 = vpop.f32.mrb[0].mxu0
        %883 = vdwg.mxu0
        %v885 = vsel %vm496, %v645, 0
        %v888 = vsel %vm496, %v650, 0
        %890 = vmatprep.subr.mxu0 0.0
        %891 = vmatpush1.msra.mxu0 %v485
        %892 = vmatprep.subr.mxu0 0.0
        %893 = vmatpush1.msra.mxu0 %v486
        %894 = vmatprep.subr.mxu0 0.0
        %895 = vmatpush1.msra.mxu0 0.0
        %896 = vmatprep.subr.mxu0 0.0
        %897 = vmatpush1.msra.mxu0 0.0
        %898 = vmatprep.subr.mxu0 0.0
        %899 = vmatpush1.msra.mxu0 0.0
        %900 = vmatprep.subr.mxu0 0.0
        %901 = vmatpush1.msra.mxu0 0.0
        %902 = vmatprep.subr.mxu0 0.0
        %903 = vmatpush1.msra.mxu0 0.0
        %904 = vmatprep.subr.mxu0 0.0
        %905 = vmatpush1.msra.mxu0 0.0
        %906 = vmatprep.subr.mxu0 0.0
        %907 = vmatpush1.msra.mxu0 0.0
        %908 = vmatprep.subr.mxu0 0.0
        %909 = vmatpush1.msra.mxu0 0.0
        %910 = vmatprep.subr.mxu0 0.0
        %911 = vmatpush1.msra.mxu0 0.0
        %912 = vmatprep.subr.mxu0 0.0
        %913 = vmatpush1.msra.mxu0 0.0
        %914 = vmatprep.subr.mxu0 0.0
        %915 = vmatpush1.msra.mxu0 0.0
        %916 = vmatprep.subr.mxu0 0.0
        %917 = vmatpush1.msra.mxu0 0.0
        %918 = vmatprep.subr.mxu0 0.0
        %919 = vmatpush1.msra.mxu0 0.0
        %920 = vmatprep.subr.mxu0 0.0
        %921 = vmatpush1.msra.mxu0 0.0
        %922 = vmatprep.subr.mxu0 0.0
        %923 = vmatpush1.msra.mxu0 0.0
        %924 = vmatprep.subr.mxu0 0.0
        %925 = vmatpush1.msra.mxu0 0.0
        %926 = vmatprep.subr.mxu0 0.0
        %927 = vmatpush1.msra.mxu0 0.0
        %928 = vmatprep.subr.mxu0 0.0
        %929 = vmatpush1.msra.mxu0 0.0
        %930 = vmatprep.subr.mxu0 0.0
        %931 = vmatpush1.msra.mxu0 0.0
        %932 = vmatprep.subr.mxu0 0.0
        %933 = vmatpush1.msra.mxu0 0.0
        %934 = vmatprep.subr.mxu0 0.0
        %935 = vmatpush1.msra.mxu0 0.0
        %936 = vmatprep.subr.mxu0 0.0
        %937 = vmatpush1.msra.mxu0 0.0
        %938 = vmatprep.subr.mxu0 0.0
        %939 = vmatpush1.msra.mxu0 0.0
        %940 = vmatprep.subr.mxu0 0.0
        %941 = vmatpush1.msra.mxu0 0.0
        %942 = vmatprep.subr.mxu0 0.0
        %943 = vmatpush1.msra.mxu0 0.0
        %944 = vmatprep.subr.mxu0 0.0
        %945 = vmatpush1.msra.mxu0 0.0
        %946 = vmatprep.subr.mxu0 0.0
        %947 = vmatpush1.msra.mxu0 0.0
        %948 = vmatprep.subr.mxu0 0.0
        %949 = vmatpush1.msra.mxu0 0.0
        %950 = vmatprep.subr.mxu0 0.0
        %951 = vmatpush1.msra.mxu0 0.0
        %952 = vmatprep.subr.mxu0 0.0
        %953 = vmatpush1.msra.mxu0 0.0
        %954 = vmatprep.mubr.f32.mxu0 0.0
        %955 = vmatmul.mubr.f32.gmra.mrb[0].mxu0 %v885
        %v956 = vpop.f32.mrb[0].mxu0
        %v957 = vadd.f32 0.0, %v956
        %v958 = vpop.f32.mrb[0].mxu0
        %959 = vmatprep.mubr.f32.mxu0 0.0
        %960 = vmatmul.mubr.f32.gmra.mrb[0].mxu0 %v888
        %v961 = vpop.f32.mrb[0].mxu0
        %v962 = vadd.f32 0.0, %v961
        %v963 = vpop.f32.mrb[0].mxu0
        %964 = vdwg.mxu0
        %v966 = vsel %vm496, %v720, 0
        %v969 = vsel %vm496, %v725, 0
        %971 = vmatprep.subr.mxu0 0.0
        %972 = vmatpush1.msra.mxu0 %v485
        %973 = vmatprep.subr.mxu0 0.0
        %974 = vmatpush1.msra.mxu0 %v486
        %975 = vmatprep.subr.mxu0 0.0
        %976 = vmatpush1.msra.mxu0 0.0
        %977 = vmatprep.subr.mxu0 0.0
        %978 = vmatpush1.msra.mxu0 0.0
        %979 = vmatprep.subr.mxu0 0.0
        %980 = vmatpush1.msra.mxu0 0.0
        %981 = vmatprep.subr.mxu0 0.0
        %982 = vmatpush1.msra.mxu0 0.0
        %983 = vmatprep.subr.mxu0 0.0
        %984 = vmatpush1.msra.mxu0 0.0
        %985 = vmatprep.subr.mxu0 0.0
        %986 = vmatpush1.msra.mxu0 0.0
        %987 = vmatprep.subr.mxu0 0.0
        %988 = vmatpush1.msra.mxu0 0.0
        %989 = vmatprep.subr.mxu0 0.0
        %990 = vmatpush1.msra.mxu0 0.0
        %991 = vmatprep.subr.mxu0 0.0
        %992 = vmatpush1.msra.mxu0 0.0
        %993 = vmatprep.subr.mxu0 0.0
        %994 = vmatpush1.msra.mxu0 0.0
        %995 = vmatprep.subr.mxu0 0.0
        %996 = vmatpush1.msra.mxu0 0.0
        %997 = vmatprep.subr.mxu0 0.0
        %998 = vmatpush1.msra.mxu0 0.0
        %999 = vmatprep.subr.mxu0 0.0
        %1000 = vmatpush1.msra.mxu0 0.0
        %1001 = vmatprep.subr.mxu0 0.0
        %1002 = vmatpush1.msra.mxu0 0.0
        %1003 = vmatprep.subr.mxu0 0.0
        %1004 = vmatpush1.msra.mxu0 0.0
        %1005 = vmatprep.subr.mxu0 0.0
        %1006 = vmatpush1.msra.mxu0 0.0
        %1007 = vmatprep.subr.mxu0 0.0
        %1008 = vmatpush1.msra.mxu0 0.0
        %1009 = vmatprep.subr.mxu0 0.0
        %1010 = vmatpush1.msra.mxu0 0.0
        %1011 = vmatprep.subr.mxu0 0.0
        %1012 = vmatpush1.msra.mxu0 0.0
        %1013 = vmatprep.subr.mxu0 0.0
        %1014 = vmatpush1.msra.mxu0 0.0
        %1015 = vmatprep.subr.mxu0 0.0
        %1016 = vmatpush1.msra.mxu0 0.0
        %1017 = vmatprep.subr.mxu0 0.0
        %1018 = vmatpush1.msra.mxu0 0.0
        %1019 = vmatprep.subr.mxu0 0.0
        %1020 = vmatpush1.msra.mxu0 0.0
        %1021 = vmatprep.subr.mxu0 0.0
        %1022 = vmatpush1.msra.mxu0 0.0
        %1023 = vmatprep.subr.mxu0 0.0
        %1024 = vmatpush1.msra.mxu0 0.0
        %1025 = vmatprep.subr.mxu0 0.0
        %1026 = vmatpush1.msra.mxu0 0.0
        %1027 = vmatprep.subr.mxu0 0.0
        %1028 = vmatpush1.msra.mxu0 0.0
        %1029 = vmatprep.subr.mxu0 0.0
        %1030 = vmatpush1.msra.mxu0 0.0
        %1031 = vmatprep.subr.mxu0 0.0
        %1032 = vmatpush1.msra.mxu0 0.0
        %1033 = vmatprep.subr.mxu0 0.0
        %1034 = vmatpush1.msra.mxu0 0.0
        %1035 = vmatprep.mubr.f32.mxu0 0.0
        %1036 = vmatmul.mubr.f32.gmra.mrb[0].mxu0 %v966
        %v1037 = vpop.f32.mrb[0].mxu0
        %v1038 = vadd.f32 0.0, %v1037
        %v1039 = vpop.f32.mrb[0].mxu0
        %1040 = vmatprep.mubr.f32.mxu0 0.0
        %1041 = vmatmul.mubr.f32.gmra.mrb[0].mxu0 %v969
        %v1042 = vpop.f32.mrb[0].mxu0
        %v1043 = vadd.f32 0.0, %v1042
        %v1044 = vpop.f32.mrb[0].mxu0
        %1045 = vdwg.mxu0
        %v1047 = vsel %vm496, %v795, 0
        %v1050 = vsel %vm496, %v800, 0
        %1052 = vmatprep.subr.mxu0 0.0
        %1053 = vmatpush1.msra.mxu0 %v485
        %1054 = vmatprep.subr.mxu0 0.0
        %1055 = vmatpush1.msra.mxu0 %v486
        %1056 = vmatprep.subr.mxu0 0.0
        %1057 = vmatpush1.msra.mxu0 0.0
        %1058 = vmatprep.subr.mxu0 0.0
        %1059 = vmatpush1.msra.mxu0 0.0
        %1060 = vmatprep.subr.mxu0 0.0
        %1061 = vmatpush1.msra.mxu0 0.0
        %1062 = vmatprep.subr.mxu0 0.0
        %1063 = vmatpush1.msra.mxu0 0.0
        %1064 = vmatprep.subr.mxu0 0.0
        %1065 = vmatpush1.msra.mxu0 0.0
        %1066 = vmatprep.subr.mxu0 0.0
        %1067 = vmatpush1.msra.mxu0 0.0
        %1068 = vmatprep.subr.mxu0 0.0
        %1069 = vmatpush1.msra.mxu0 0.0
        %1070 = vmatprep.subr.mxu0 0.0
        %1071 = vmatpush1.msra.mxu0 0.0
        %1072 = vmatprep.subr.mxu0 0.0
        %1073 = vmatpush1.msra.mxu0 0.0
        %1074 = vmatprep.subr.mxu0 0.0
        %1075 = vmatpush1.msra.mxu0 0.0
        %1076 = vmatprep.subr.mxu0 0.0
        %1077 = vmatpush1.msra.mxu0 0.0
        %1078 = vmatprep.subr.mxu0 0.0
        %1079 = vmatpush1.msra.mxu0 0.0
        %1080 = vmatprep.subr.mxu0 0.0
        %1081 = vmatpush1.msra.mxu0 0.0
        %1082 = vmatprep.subr.mxu0 0.0
        %1083 = vmatpush1.msra.mxu0 0.0
        %1084 = vmatprep.subr.mxu0 0.0
        %1085 = vmatpush1.msra.mxu0 0.0
        %1086 = vmatprep.subr.mxu0 0.0
        %1087 = vmatpush1.msra.mxu0 0.0
        %1088 = vmatprep.subr.mxu0 0.0
        %1089 = vmatpush1.msra.mxu0 0.0
        %1090 = vmatprep.subr.mxu0 0.0
        %1091 = vmatpush1.msra.mxu0 0.0
        %1092 = vmatprep.subr.mxu0 0.0
        %1093 = vmatpush1.msra.mxu0 0.0
        %1094 = vmatprep.subr.mxu0 0.0
        %1095 = vmatpush1.msra.mxu0 0.0
        %1096 = vmatprep.subr.mxu0 0.0
        %1097 = vmatpush1.msra.mxu0 0.0
        %1098 = vmatprep.subr.mxu0 0.0
        %1099 = vmatpush1.msra.mxu0 0.0
        %1100 = vmatprep.subr.mxu0 0.0
        %1101 = vmatpush1.msra.mxu0 0.0
        %1102 = vmatprep.subr.mxu0 0.0
        %1103 = vmatpush1.msra.mxu0 0.0
        %1104 = vmatprep.subr.mxu0 0.0
        %1105 = vmatpush1.msra.mxu0 0.0
        %1106 = vmatprep.subr.mxu0 0.0
        %1107 = vmatpush1.msra.mxu0 0.0
        %1108 = vmatprep.subr.mxu0 0.0
        %1109 = vmatpush1.msra.mxu0 0.0
        %1110 = vmatprep.subr.mxu0 0.0
        %1111 = vmatpush1.msra.mxu0 0.0
        %1112 = vmatprep.subr.mxu0 0.0
        %1113 = vmatpush1.msra.mxu0 0.0
        %1114 = vmatprep.subr.mxu0 0.0
        %1115 = vmatpush1.msra.mxu0 0.0
        %1116 = vmatprep.mubr.f32.mxu0 0.0
        %1117 = vmatmul.mubr.f32.gmra.mrb[0].mxu0 %v1047
        %v1118 = vpop.f32.mrb[0].mxu0
        %v1119 = vadd.f32 0.0, %v1118
        %v1120 = vpop.f32.mrb[0].mxu0
        %1121 = vmatprep.mubr.f32.mxu0 0.0
        %1122 = vmatmul.mubr.f32.gmra.mrb[0].mxu0 %v1050
        %v1123 = vpop.f32.mrb[0].mxu0
        %v1124 = vadd.f32 0.0, %v1123
        %v1125 = vpop.f32.mrb[0].mxu0
        %1126 = vdwg.mxu0
        %v1127 = vcombine.low %v876, %v1038
        %v1128 = vcombine.high %v876, %v1038
        %v1130 = vunpack.c.l.s4 1983009808
        %v1131 = vunpack.c.0.s8 %v1130
        %v1132 = vlaneseq
        %v1133 = vshrl.u32 %v1132, 7
        %v1134 = vsub.s32 %v1131, %v1133
        %v1135 = vrot.slane %v1127, %v1134
        %v1137 = vunpack.c.l.s4 1983009808
        %v1138 = vunpack.c.0.s8 %v1137
        %v1139 = vlaneseq
        %v1140 = vshrl.u32 %v1139, 7
        %v1141 = vsub.s32 %v1138, %v1140
        %v1142 = vrot.slane %v1128, %v1141
        %v1143 = vcombine.low %v957, %v1119
        %v1144 = vcombine.high %v957, %v1119
        %v1146 = vunpack.c.l.s4 1983009808
        %v1147 = vunpack.c.0.s8 %v1146
        %v1148 = vlaneseq
        %v1149 = vshrl.u32 %v1148, 7
        %v1150 = vsub.s32 %v1147, %v1149
        %v1151 = vrot.slane %v1143, %v1150
        %v1153 = vunpack.c.l.s4 1983009808
        %v1154 = vunpack.c.0.s8 %v1153
        %v1155 = vlaneseq
        %v1156 = vshrl.u32 %v1155, 7
        %v1157 = vsub.s32 %v1154, %v1156
        %v1158 = vrot.slane %v1144, %v1157
        %v1159 = vcombine.low %v1135, %v1151
        %v1160 = vcombine.high %v1135, %v1151
        %v1162 = vunpack.c.l.s4 1934713408
        %v1163 = vunpack.c.0.s8 %v1162
        %v1164 = vlaneseq
        %v1165 = vshrl.u32 %v1164, 7
        %v1166 = vsub.s32 %v1163, %v1165
        %v1167 = vrot.slane %v1159, %v1166
        %v1169 = vunpack.c.l.s4 1934713408
        %v1170 = vunpack.c.0.s8 %v1169
        %v1171 = vlaneseq
        %v1172 = vshrl.u32 %v1171, 7
        %v1173 = vsub.s32 %v1170, %v1172
        %v1174 = vrot.slane %v1160, %v1173
        %v1175 = vcombine.low %v1142, %v1158
        %v1176 = vcombine.high %v1142, %v1158
        %v1178 = vunpack.c.l.s4 1934713408
        %v1179 = vunpack.c.0.s8 %v1178
        %v1180 = vlaneseq
        %v1181 = vshrl.u32 %v1180, 7
        %v1182 = vsub.s32 %v1179, %v1181
        %v1183 = vrot.slane %v1175, %v1182
        %v1185 = vunpack.c.l.s4 1934713408
        %v1186 = vunpack.c.0.s8 %v1185
        %v1187 = vlaneseq
        %v1188 = vshrl.u32 %v1187, 7
        %v1189 = vsub.s32 %v1186, %v1188
        %v1190 = vrot.slane %v1176, %v1189
        %v1191 = vcombine.high %v1167, 0.0
        %v1192 = vcombine.high %v1174, 0.0
        %v1193 = vcombine.high %v1183, 0.0
        %v1194 = vcombine.high %v1190, 0.0
        %v1195 = vcombine.low %v881, %v1043
        %v1196 = vcombine.high %v881, %v1043
        %v1198 = vunpack.c.l.s4 1983009808
        %v1199 = vunpack.c.0.s8 %v1198
        %v1200 = vlaneseq
        %v1201 = vshrl.u32 %v1200, 7
        %v1202 = vsub.s32 %v1199, %v1201
        %v1203 = vrot.slane %v1195, %v1202
        %v1205 = vunpack.c.l.s4 1983009808
        %v1206 = vunpack.c.0.s8 %v1205
        %v1207 = vlaneseq
        %v1208 = vshrl.u32 %v1207, 7
        %v1209 = vsub.s32 %v1206, %v1208
        %v1210 = vrot.slane %v1196, %v1209
        %v1211 = vcombine.low %v962, %v1124
        %v1212 = vcombine.high %v962, %v1124
        %v1214 = vunpack.c.l.s4 1983009808
        %v1215 = vunpack.c.0.s8 %v1214
        %v1216 = vlaneseq
        %v1217 = vshrl.u32 %v1216, 7
        %v1218 = vsub.s32 %v1215, %v1217
        %v1219 = vrot.slane %v1211, %v1218
        %v1221 = vunpack.c.l.s4 1983009808
        %v1222 = vunpack.c.0.s8 %v1221
        %v1223 = vlaneseq
        %v1224 = vshrl.u32 %v1223, 7
        %v1225 = vsub.s32 %v1222, %v1224
        %v1226 = vrot.slane %v1212, %v1225
        %v1227 = vcombine.low %v1203, %v1219
        %v1228 = vcombine.high %v1203, %v1219
        %v1230 = vunpack.c.l.s4 1934713408
        %v1231 = vunpack.c.0.s8 %v1230
        %v1232 = vlaneseq
        %v1233 = vshrl.u32 %v1232, 7
        %v1234 = vsub.s32 %v1231, %v1233
        %v1235 = vrot.slane %v1227, %v1234
        %v1237 = vunpack.c.l.s4 1934713408
        %v1238 = vunpack.c.0.s8 %v1237
        %v1239 = vlaneseq
        %v1240 = vshrl.u32 %v1239, 7
        %v1241 = vsub.s32 %v1238, %v1240
        %v1242 = vrot.slane %v1228, %v1241
        %v1243 = vcombine.low %v1210, %v1226
        %v1244 = vcombine.high %v1210, %v1226
        %v1246 = vunpack.c.l.s4 1934713408
        %v1247 = vunpack.c.0.s8 %v1246
        %v1248 = vlaneseq
        %v1249 = vshrl.u32 %v1248, 7
        %v1250 = vsub.s32 %v1247, %v1249
        %v1251 = vrot.slane %v1243, %v1250
        %v1253 = vunpack.c.l.s4 1934713408
        %v1254 = vunpack.c.0.s8 %v1253
        %v1255 = vlaneseq
        %v1256 = vshrl.u32 %v1255, 7
        %v1257 = vsub.s32 %v1254, %v1256
        %v1258 = vrot.slane %v1244, %v1257
        %v1259 = vcombine.high %v1235, 0.0
        %v1260 = vcombine.high %v1242, 0.0
        %v1261 = vcombine.high %v1251, 0.0
        %v1262 = vcombine.high %v1258, 0.0
        %1264 = vrot.lane.b32.xlu0 %v1191, 16
        %v1265 = vpop.permute.xlu0 %1264
        %1268 = vrot.lane.b32.xlu0 %v1174, 32
        %v1269 = vpop.permute.xlu0 %1268
        %1272 = vrot.lane.b32.xlu0 %v1192, 48
        %v1273 = vpop.permute.xlu0 %1272
        %1276 = vrot.lane.b32.xlu0 %v1183, 64
        %v1277 = vpop.permute.xlu0 %1276
        %1280 = vrot.lane.b32.xlu0 %v1193, 80
        %v1281 = vpop.permute.xlu0 %1280
        %1284 = vrot.lane.b32.xlu0 %v1190, 96
        %v1285 = vpop.permute.xlu0 %1284
        %1288 = vrot.lane.b32.xlu0 %v1194, 112
        %v1289 = vpop.permute.xlu0 %1288
        %1292 = vrot.lane.b32.xlu0 %v1259, 16
        %v1293 = vpop.permute.xlu0 %1292
        %1296 = vrot.lane.b32.xlu0 %v1242, 32
        %v1297 = vpop.permute.xlu0 %1296
        %1300 = vrot.lane.b32.xlu0 %v1260, 48
        %v1301 = vpop.permute.xlu0 %1300
        %1304 = vrot.lane.b32.xlu0 %v1251, 64
        %v1305 = vpop.permute.xlu0 %1304
        %1308 = vrot.lane.b32.xlu0 %v1261, 80
        %v1309 = vpop.permute.xlu0 %1308
        %1312 = vrot.lane.b32.xlu0 %v1258, 96
        %v1313 = vpop.permute.xlu0 %1312
        %1316 = vrot.lane.b32.xlu0 %v1262, 112
        %v1317 = vpop.permute.xlu0 %1316
        %v1319 = vsel %vm496, %v1167, %v1265
        %vm1320 = vcmask 261120
        %v1321 = vsel %vm1320, %v1319, %v1269
        %vm1322 = vcmask 392192
        %v1323 = vsel %vm1322, %v1321, %v1273
        %vm1324 = vcmask 523264
        %v1325 = vsel %vm1324, %v1323, %v1277
        %vm1326 = vcmask 654336
        %v1327 = vsel %vm1326, %v1325, %v1281
        %vm1328 = vcmask 785408
        %v1329 = vsel %vm1328, %v1327, %v1285
        %vm1330 = vcmask 916480
        %v1331 = vsel %vm1330, %v1329, %v1289
        %v1332 = vsel %vm496, %v1235, %v1293
        %v1333 = vsel %vm1320, %v1332, %v1297
        %v1334 = vsel %vm1322, %v1333, %v1301
        %v1335 = vsel %vm1324, %v1334, %v1305
        %v1336 = vsel %vm1326, %v1335, %v1309
        %v1337 = vsel %vm1328, %v1336, %v1313
        %v1338 = vsel %vm1330, %v1337, %v1317
        %v1339 = vld [vmem:[%s7] sm:$0x1]
        %v1340 = vld [vmem:[%s476] sm:$0x1]
        %v1341 = vadd.f32 %v1339, %v1340
        %v1342 = vld [vmem:[%s6] sm:$0xff]
        %v1343 = vld [vmem:[%s6 + $0x8] sm:$0xff]
        %v1344 = vld [vmem:[%s6 + $0x10] sm:$0xff]
        %v1345 = vld [vmem:[%s6 + $0x18] sm:$0xff]
        %v1346 = vlaneseq
        %v1347 = vshrl.u32 %v1346, 7
        %v1348 = vsub.s32 0, %v1347
        %v1349 = vrot.slane %v1341, %v1348
        %1351 = vbcast.lane.b32.xlu0 %v1349, 256
        %v1352 = vpop.permute.xlu0 %1351
        %s1354 = sor.u32 256, 8
        %1355 = vbcast.lane.b32.xlu0 %v1349, %s1354
        %v1356 = vpop.permute.xlu0 %1355
        %s1358 = sor.u32 256, 16
        %1359 = vbcast.lane.b32.xlu0 %v1349, %s1358
        %v1360 = vpop.permute.xlu0 %1359
        %s1362 = sor.u32 256, 24
        %1363 = vbcast.lane.b32.xlu0 %v1349, %s1362
        %v1364 = vpop.permute.xlu0 %1363
        %vm1365 = vcmask 31744
        %v1367 = vsel %vm1365, %v1342, 0
        %v1370 = vsel %vm1365, %v1343, 0
        %v1373 = vsel %vm1365, %v1344, 0
        %v1376 = vsel %vm1365, %v1345, 0
        %vm1378 = vcmask 1043456
        %v1380 = vsel %vm1378, %v1331, 0
        %v1383 = vsel %vm1378, %v1338, 0
        %1385 = vmatprep.subr.mxu0 %v1383
        %1386 = vmatpush1.msra.mxu0 %v1380
        %1387 = vmatprep.subr.mxu0 0.0
        %1388 = vmatpush1.msra.mxu0 0.0
        %1389 = vmatprep.subr.mxu0 0.0
        %1390 = vmatpush1.msra.mxu0 0.0
        %1391 = vmatprep.subr.mxu0 0.0
        %1392 = vmatpush1.msra.mxu0 0.0
        %1393 = vmatprep.subr.mxu0 0.0
        %1394 = vmatpush1.msra.mxu0 0.0
        %1395 = vmatprep.subr.mxu0 0.0
        %1396 = vmatpush1.msra.mxu0 0.0
        %1397 = vmatprep.subr.mxu0 0.0
        %1398 = vmatpush1.msra.mxu0 0.0
        %1399 = vmatprep.subr.mxu0 0.0
        %1400 = vmatpush1.msra.mxu0 0.0
        %1401 = vmatprep.subr.mxu0 0.0
        %1402 = vmatpush1.msra.mxu0 0.0
        %1403 = vmatprep.subr.mxu0 0.0
        %1404 = vmatpush1.msra.mxu0 0.0
        %1405 = vmatprep.subr.mxu0 0.0
        %1406 = vmatpush1.msra.mxu0 0.0
        %1407 = vmatprep.subr.mxu0 0.0
        %1408 = vmatpush1.msra.mxu0 0.0
        %1409 = vmatprep.subr.mxu0 0.0
        %1410 = vmatpush1.msra.mxu0 0.0
        %1411 = vmatprep.subr.mxu0 0.0
        %1412 = vmatpush1.msra.mxu0 0.0
        %1413 = vmatprep.subr.mxu0 0.0
        %1414 = vmatpush1.msra.mxu0 0.0
        %1415 = vmatprep.subr.mxu0 0.0
        %1416 = vmatpush1.msra.mxu0 0.0
        %1417 = vmatprep.subr.mxu0 0.0
        %1418 = vmatpush1.msra.mxu0 0.0
        %1419 = vmatprep.subr.mxu0 0.0
        %1420 = vmatpush1.msra.mxu0 0.0
        %1421 = vmatprep.subr.mxu0 0.0
        %1422 = vmatpush1.msra.mxu0 0.0
        %1423 = vmatprep.subr.mxu0 0.0
        %1424 = vmatpush1.msra.mxu0 0.0
        %1425 = vmatprep.subr.mxu0 0.0
        %1426 = vmatpush1.msra.mxu0 0.0
        %1427 = vmatprep.subr.mxu0 0.0
        %1428 = vmatpush1.msra.mxu0 0.0
        %1429 = vmatprep.subr.mxu0 0.0
        %1430 = vmatpush1.msra.mxu0 0.0
        %1431 = vmatprep.subr.mxu0 0.0
        %1432 = vmatpush1.msra.mxu0 0.0
        %1433 = vmatprep.subr.mxu0 0.0
        %1434 = vmatpush1.msra.mxu0 0.0
        %1435 = vmatprep.subr.mxu0 0.0
        %1436 = vmatpush1.msra.mxu0 0.0
        %1437 = vmatprep.subr.mxu0 0.0
        %1438 = vmatpush1.msra.mxu0 0.0
        %1439 = vmatprep.subr.mxu0 0.0
        %1440 = vmatpush1.msra.mxu0 0.0
        %1441 = vmatprep.subr.mxu0 0.0
        %1442 = vmatpush1.msra.mxu0 0.0
        %1443 = vmatprep.subr.mxu0 0.0
        %1444 = vmatpush1.msra.mxu0 0.0
        %1445 = vmatprep.subr.mxu0 0.0
        %1446 = vmatpush1.msra.mxu0 0.0
        %1447 = vmatprep.subr.mxu0 0.0
        %1448 = vmatpush1.msra.mxu0 0.0
        %1449 = vmatprep.mubr.f32.mxu0 0.0
        %1450 = vmatmul.mubr.f32.gmra.mrb[0].mxu0 %v1367
        %v1451 = vpop.f32.mrb[0].mxu0
        %v1452 = vadd.f32 %v1352, %v1451
        %v1453 = vpop.f32.mrb[0].mxu0
        %v1454 = vadd.f32 %v1352, %v1453
        %1455 = vmatprep.mubr.f32.mxu0 0.0
        %1456 = vmatmul.mubr.f32.gmra.mrb[0].mxu0 %v1370
        %v1457 = vpop.f32.mrb[0].mxu0
        %v1458 = vadd.f32 %v1356, %v1457
        %v1459 = vpop.f32.mrb[0].mxu0
        %v1460 = vadd.f32 %v1356, %v1459
        %1461 = vmatprep.mubr.f32.mxu0 0.0
        %1462 = vmatmul.mubr.f32.gmra.mrb[0].mxu0 %v1373
        %v1463 = vpop.f32.mrb[0].mxu0
        %v1464 = vadd.f32 %v1360, %v1463
        %v1465 = vpop.f32.mrb[0].mxu0
        %v1466 = vadd.f32 %v1360, %v1465
        %1467 = vmatprep.mubr.f32.mxu0 0.0
        %1468 = vmatmul.mubr.f32.gmra.mrb[0].mxu0 %v1376
        %v1469 = vpop.f32.mrb[0].mxu0
        %v1470 = vadd.f32 %v1364, %v1469
        %v1471 = vpop.f32.mrb[0].mxu0
        %v1472 = vadd.f32 %v1364, %v1471
        %1473 = vdwg.mxu0
        %v1474 = vmax.f32 %v1452, 0.0
        %v1475 = vmax.f32 %v1454, 0.0
        %v1476 = vmax.f32 %v1458, 0.0
        %v1477 = vmax.f32 %v1460, 0.0
        %v1478 = vmax.f32 %v1464, 0.0
        %v1479 = vmax.f32 %v1466, 0.0
        %v1480 = vmax.f32 %v1470, 0.0
        %v1481 = vmax.f32 %v1472, 0.0
        %v1482 = vld [vmem:[%s8] sm:$0xf]
        %v1483 = vld [vmem:[%s9] sm:$0x1]
        %v1484 = vlaneseq
        %v1485 = vshrl.u32 %v1484, 7
        %v1486 = vsub.s32 0, %v1485
        %v1487 = vrot.slane %v1483, %v1486
        %1489 = vbcast.lane.b32.xlu0 %v1487, 256
        %v1490 = vpop.permute.xlu0 %1489
        %v1492 = vsel %vm1320, %v1482, 0
        %1494 = vmatprep.subr.mxu0 %v1475
        %1495 = vmatpush1.msra.mxu0 %v1474
        %1496 = vmatprep.subr.mxu0 %v1477
        %1497 = vmatpush1.msra.mxu0 %v1476
        %1498 = vmatprep.subr.mxu0 %v1479
        %1499 = vmatpush1.msra.mxu0 %v1478
        %1500 = vmatprep.subr.mxu0 %v1481
        %1501 = vmatpush1.msra.mxu0 %v1480
        %1502 = vmatprep.subr.mxu0 0.0
        %1503 = vmatpush1.msra.mxu0 0.0
        %1504 = vmatprep.subr.mxu0 0.0
        %1505 = vmatpush1.msra.mxu0 0.0
        %1506 = vmatprep.subr.mxu0 0.0
        %1507 = vmatpush1.msra.mxu0 0.0
        %1508 = vmatprep.subr.mxu0 0.0
        %1509 = vmatpush1.msra.mxu0 0.0
        %1510 = vmatprep.subr.mxu0 0.0
        %1511 = vmatpush1.msra.mxu0 0.0
        %1512 = vmatprep.subr.mxu0 0.0
        %1513 = vmatpush1.msra.mxu0 0.0
        %1514 = vmatprep.subr.mxu0 0.0
        %1515 = vmatpush1.msra.mxu0 0.0
        %1516 = vmatprep.subr.mxu0 0.0
        %1517 = vmatpush1.msra.mxu0 0.0
        %1518 = vmatprep.subr.mxu0 0.0
        %1519 = vmatpush1.msra.mxu0 0.0
        %1520 = vmatprep.subr.mxu0 0.0
        %1521 = vmatpush1.msra.mxu0 0.0
        %1522 = vmatprep.subr.mxu0 0.0
        %1523 = vmatpush1.msra.mxu0 0.0
        %1524 = vmatprep.subr.mxu0 0.0
        %1525 = vmatpush1.msra.mxu0 0.0
        %1526 = vmatprep.subr.mxu0 0.0
        %1527 = vmatpush1.msra.mxu0 0.0
        %1528 = vmatprep.subr.mxu0 0.0
        %1529 = vmatpush1.msra.mxu0 0.0
        %1530 = vmatprep.subr.mxu0 0.0
        %1531 = vmatpush1.msra.mxu0 0.0
        %1532 = vmatprep.subr.mxu0 0.0
        %1533 = vmatpush1.msra.mxu0 0.0
        %1534 = vmatprep.subr.mxu0 0.0
        %1535 = vmatpush1.msra.mxu0 0.0
        %1536 = vmatprep.subr.mxu0 0.0
        %1537 = vmatpush1.msra.mxu0 0.0
        %1538 = vmatprep.subr.mxu0 0.0
        %1539 = vmatpush1.msra.mxu0 0.0
        %1540 = vmatprep.subr.mxu0 0.0
        %1541 = vmatpush1.msra.mxu0 0.0
        %1542 = vmatprep.subr.mxu0 0.0
        %1543 = vmatpush1.msra.mxu0 0.0
        %1544 = vmatprep.subr.mxu0 0.0
        %1545 = vmatpush1.msra.mxu0 0.0
        %1546 = vmatprep.subr.mxu0 0.0
        %1547 = vmatpush1.msra.mxu0 0.0
        %1548 = vmatprep.subr.mxu0 0.0
        %1549 = vmatpush1.msra.mxu0 0.0
        %1550 = vmatprep.subr.mxu0 0.0
        %1551 = vmatpush1.msra.mxu0 0.0
        %1552 = vmatprep.subr.mxu0 0.0
        %1553 = vmatpush1.msra.mxu0 0.0
        %1554 = vmatprep.subr.mxu0 0.0
        %1555 = vmatpush1.msra.mxu0 0.0
        %1556 = vmatprep.subr.mxu0 0.0
        %1557 = vmatpush1.msra.mxu0 0.0
        %1558 = vmatprep.mubr.f32.mxu0 0.0
        %1559 = vmatmul.mubr.f32.gmra.mrb[0].mxu0 %v1492
        %v1560 = vpop.f32.mrb[0].mxu0
        %v1561 = vadd.f32 %v1490, %v1560
        %v1562 = vpop.f32.mrb[0].mxu0
        %v1563 = vadd.f32 %v1490, %v1562
        %1564 = vdwg.mxu0
        %v1567 = vcombine.low %v1561, %v1563
        %v1569 = vsub.f32 %v495, %v1567
        %v1570 = vand.u32 2147483647, %v1569
        %v1572 = vcombine.high %v1570, %v1570
        %v1574 = vsel %vm1378, %v1570, 0.0
        %v1575 = vsel %vm1378, %v1572, 0.0
        %v1576 = vadd.f32 %v1574, %v1575
        %1577 = vadd.xlane.f32.xlu0 %v1576
        %v1578 = vpop.xlane.xlu0 %1577
        %v1579 = vrot.slane %v1578, 4
        %v1580 = vadd.f32 %v1578, %v1579
        %v1581 = vrot.slane %v1580, 2
        %v1582 = vadd.f32 %v1580, %v1581
        %v1583 = vrot.slane %v1582, 1
        %v1584 = vadd.f32 %v1582, %v1583
        %s1585 = vtos %v1584
        %v1586 = vstv %s1585
        %1587 = vst [vmem:[%s470] sm:$0x1] %v1586
        %s1588 = sand.u32 %s264, 1
        %s1589 = scalar_lea.sflag [#allocation6], %s1588
        %s1590 = sand.u32 %s264, 1
        %s1591 = scalar_lea.vmem [#allocation10], %s1590
        // Predicated region
        $region69: #{tpu_custom_call.1} parent=55 // pred_check
          %p1592 = pneg %p274
        $region70: #{tpu_custom_call.1} parent=55 // pred_check_branch
          %1594 = sbr.rel (%p1592) target = $region72
        $region71: #{tpu_custom_call.1} parent=55 // pred_region
          %s1596 = ssub.s32 16, 16
          %1597 = vsyncadd %s1589, %s1596
          %s1598 = smul.addr %s36, 16
          %s1599 = scalar_lea.hbm %s10, %s1598
          %s1601 = sshll.u32 %s1591, 4
          %s1602 = int_to_ptr.vmem [resolvable:$true] %s1601
          %1604 = dma.vmem_to_hbm [thread:$0]  %s1602, 16, %s1599, %s1589
        $region72: #{tpu_custom_call.1} parent=55 // pred_fallthru
          _
      $region56: #{tpu_custom_call.1} parent=5 // pred_fallthru
        _
      %p1605 = scmp.le.s32.totalorder 2, %s31
      // Predicated region
      $region73: #{tpu_custom_call.1} parent=5 // pred_check
        %p1606 = pneg %p1605
      $region74: #{tpu_custom_call.1} parent=5 // pred_check_branch
        %1608 = sbr.rel (%p1606) target = $region76
      $region75: #{tpu_custom_call.1} parent=5 // pred_region
        %s1609 = ssub.s32 %s31, 2
        // Predicated region
        $region77: #{tpu_custom_call.1} parent=75 // pred_check
          %p1610 = pneg %p280
        $region78: #{tpu_custom_call.1} parent=75 // pred_check_branch
          %1612 = sbr.rel (%p1610) target = $region80
        $region79: #{tpu_custom_call.1} parent=75 // pred_region
          %s1613 = sand.u32 %s265, 1
          %s1614 = scalar_lea.sflag [#allocation6], %s1613
          %s1615 = sand.u32 %s265, 1
          %s1616 = scalar_lea.vmem [#allocation10], %s1615
          %1617 = dma.done %s1614, 16
        $region80: #{tpu_custom_call.1} parent=75 // pred_fallthru
          _
      $region76: #{tpu_custom_call.1} parent=5 // pred_fallthru
        _
    $region6: #{tpu_custom_call.1} parent=1 // loop_footer
      %s35 = sadd.s32 1, %s31
    $region7: #{tpu_custom_call.1} parent=1 // loop_footer_branch
      %30 = sbr.rel target = $region3
    $region8: #{tpu_custom_call.1} parent=1 // loop_exit
      _
    %1618 = vsyncpa [#allocation5], 1
    %s1619 = scalar_lea.sflag [#allocation5], 1
    %1620 = vsyncpa %s1619, 1
    %1621 = vsyncpa [#allocation8], 1
    %s1622 = scalar_lea.sflag [#allocation8], 1
    %1623 = vsyncpa %s1622, 1
    %1624 = vsyncpa [#allocation6], 1
    %s1625 = scalar_lea.sflag [#allocation6], 1
    %1626 = vsyncpa %s1625, 1

</llo_original>
